<compile_context>
chip_gen: v6e
topology: v6e:2x2x1
jax: 0.10.0
libtpu: 0.0.40
codegen_flags: <defaults>
</compile_context>

<pallas_src>
import jax
import jax.numpy as jnp
from jax import lax
from jax.experimental import pallas as pl
from jax.experimental.pallas import tpu as pltpu

EPS = 1e-5  # PyTorch default eps for InstanceNorm2d and LayerNorm


def _make_block_kernel(H, W, Cm, Cm4):
    HW = H * W
    # zero-pad width for the flattened dilated-conv shifts; rounded to a lane tile
    # so the in-kernel concatenation stays lane-aligned.
    PAD = -(-(2 * W + 2) // 128) * 128
    INV_HW = 1.0 / float(HW)

    def _var_row(h, ones_row):
        """Per-channel biased spatial variance of h[C, HW], returned in ROW form
        [1, C] via the MXU (ones @ h^T), so the rsqrt scale can be folded into the
        COLUMNS of the next conv weight without any transpose/relayout."""
        s = pl.dot(ones_row, h, trans_b=True)          # [1, C]  sum over HW
        ss = pl.dot(ones_row, h * h, trans_b=True)     # [1, C]  sum of squares
        mu = s * INV_HW
        return jnp.maximum(ss * INV_HW - mu * mu, 0.0)

    def _centered_relu(h):
        """ReLU(h - per-channel spatial mean); mean via a cheap lane reduce."""
        mu_col = jnp.sum(h, axis=1, keepdims=True) * INV_HW   # [C, 1]
        return jnp.maximum(h - mu_col, 0.0)

    def kernel(x_ref, w_ex_ref, w_mask_ref, p_small_ref, w_a1_ref, w_a2_ref,
               w_d1_ref, w_d2_ref, w_d3_ref, y_ref):
        f32 = jnp.float32
        ones_row = jnp.ones((1, HW), f32)

        # ---- ex: 1x1 conv (no bias) ------------------------------------ [Cm, HW]
        x = x_ref[0]
        out = jnp.dot(w_ex_ref[...], x, preferred_element_type=f32)

        # ---- MSGCB (GCNet 'att' pooling + channel_add fusion) --------------------
        # TODO(synk): MSGCB source was not provided; validate pooling_type /
        # fusion_types / LayerNorm placement against the real definition.
        logits = jnp.dot(w_mask_ref[...], out, preferred_element_type=f32)  # [1, HW]
        # (conv_mask bias omitted: softmax over HW is invariant to a constant shift)
        logits = logits - jnp.max(logits, axis=1, keepdims=True)
        e = jnp.exp(logits)
        inv_sum = pl.reciprocal(jnp.sum(e, axis=1, keepdims=True), approx=True)
        # context[c] = sum_p out[c, p] * softmax(logits)[p]  -> one MXU A @ B^T push
        ctx = pl.dot(out, e, trans_b=True) * inv_sum                         # [Cm, 1]

        b_a1 = p_small_ref[:, 0:1]
        g_ln = p_small_ref[:, 1:2]
        b_ln = p_small_ref[:, 2:3]
        b_a2 = p_small_ref[:, 3:4]

        # channel_add_conv: 1x1 -> LayerNorm([Cm,1,1]) -> ReLU -> 1x1
        t = jnp.dot(w_a1_ref[...], ctx, preferred_element_type=f32) + b_a1   # [Cm, 1]
        mu = jnp.mean(t, axis=0, keepdims=True)
        var = jnp.mean((t - mu) ** 2, axis=0, keepdims=True)
        t = (t - mu) * lax.rsqrt(var + EPS) * g_ln + b_ln
        t = jnp.maximum(t, 0.0)
        t = jnp.dot(w_a2_ref[...], t, preferred_element_type=f32) + b_a2     # [Cm, 1]

        out_gc = out + t                    # broadcast the channel context over lanes

        # ---- dc #1: IN(Cm) + ReLU + 1x1 (rsqrt scale folded into w_d1 columns) ---
        d1 = _centered_relu(out_gc)
        s1 = lax.rsqrt(_var_row(out_gc, ones_row) + EPS)                     # [1, Cm]
        h1 = jnp.dot(w_d1_ref[...] * s1, d1, preferred_element_type=f32)     # [Cm4, HW]

        # ---- dc #2: double IN(Cm4) + ReLU + dilated 3x3 (d=2, p=2, no bias) ------
        # IN∘IN (no affine) == one centering with a combined positive scale; the
        # scale is folded into each tap's weight columns.
        v2 = _var_row(h1, ones_row)                                          # [1, Cm4]
        s2 = lax.rsqrt(v2 + EPS) * lax.rsqrt(v2 / (v2 + EPS) + EPS)
        d2 = _centered_relu(h1)

        # Zero-padded flattened buffer: a tap shift (dy, dx) is a static lane slice
        # at offset dy*W + dx.  Row out-of-range sources land in the zero pad; only
        # column wrap-around has to be masked (mask depends on the lane index only).
        zpad = jnp.zeros((Cm4, PAD), f32)
        hp = jnp.concatenate([zpad, d2, zpad], axis=1)        # [Cm4, HW + 2*PAD]
        col = lax.broadcasted_iota(jnp.int32, (1, HW), 1) % W

        acc = jnp.zeros((Cm4, HW), f32)
        for ky in range(3):
            for kx in range(3):
                dy, dx = 2 * (ky - 1), 2 * (kx - 1)
                start = PAD + dy * W + dx
                tap = hp[:, start:start + HW]                 # [Cm4, HW], no relayout
                if dx != 0:
                    ok = jnp.logical_and(col + dx >= 0, col + dx < W)
                    tap = jnp.where(ok, tap, 0.0)
                acc = acc + jnp.dot(w_d2_ref[ky * 3 + kx] * s2, tap,
                                    preferred_element_type=f32)
        # (At production Cm4 the 9 taps would be concatenated into a single
        #  [9*Cm4, HW] im2col slab and contracted with one K = 9*Cm4 matmul; at
        #  Cm4 = 4 nine register-accumulated K=4 pushes avoid an unaligned concat.)

        # ---- dc #3: IN(Cm4) + ReLU + 1x1 (scale folded into w_d3 columns) --------
        d3 = _centered_relu(acc)
        s3 = lax.rsqrt(_var_row(acc, ones_row) + EPS)                        # [1, Cm4]
        y = jnp.dot(w_d3_ref[...] * s3, d3, preferred_element_type=f32)      # [Cout, HW]

        y_ref[0] = y + out_gc                                                # residual

    return kernel


def init_params(key, in_channel, middle_channel, out_channel):
    """Deterministic synthetic parameters, stored as [Cout, Cin] (row = output
    channel) to match the in-kernel [C, HW] layout."""
    Cm, Cm4 = middle_channel, middle_channel // 4
    ks = jax.random.split(key, 10)
    n = lambda k, s, scale=0.2: scale * jax.random.normal(k, s, jnp.float32)
    return {
        "w_ex":   n(ks[0], (Cm, in_channel)),       # Conv2d(in, mid, 1, bias=False)
        "w_mask": n(ks[1], (1, Cm)),                # MSGCB conv_mask weight
        "b_mask": n(ks[2], (1, 1)),                 # MSGCB conv_mask bias (cancels in softmax)
        "w_a1":   n(ks[3], (Cm, Cm)),               # channel_add conv 1
        "b_a1":   n(ks[4], (Cm, 1)),
        "g_ln":   jnp.ones((Cm, 1), jnp.float32),   # LayerNorm affine (default init)
        "b_ln":   jnp.zeros((Cm, 1), jnp.float32),
        "w_a2":   n(ks[5], (Cm, Cm)),               # channel_add conv 2
        "b_a2":   n(ks[6], (Cm, 1)),
        "w_d1":   n(ks[7], (Cm4, Cm)),              # Conv2d(mid, mid//4, 1, bias=False)
        "w_d2":   n(ks[8], (9, Cm4, Cm4)),          # dilated 3x3: [ky*3+kx, Cout, Cin]
        "w_d3":   n(ks[9], (out_channel, Cm4)),     # Conv2d(mid//4, out, 1, bias=False)
    }


@jax.jit
def rn_msgcb_u2_v2(x_nchw, params):
    B, Cin, H, W = x_nchw.shape
    Cm = params["w_ex"].shape[0]
    Cm4 = params["w_d1"].shape[0]
    Cout = params["w_d3"].shape[0]
    assert Cout == Cm, "residual dc(out_gc) + out_gc requires out_channel == middle_channel"
    HW = H * W
    f32 = jnp.float32

    # NCHW -> [B, C, HW]: channels on sublanes, spatial on lanes (free reshape).
    x = x_nchw.reshape(B, Cin, HW).astype(f32)

    # Pack the small per-channel MSGCB parameters into a single VMEM operand
    # (fewer DMA descriptors / double-buffered (8,128)-padded tiles per grid step).
    p_small = jnp.concatenate(
        [params["b_a1"], params["g_ln"], params["b_ln"], params["b_a2"]],
        axis=1).astype(f32)                                           # [Cm, 4]

    def full(shape):
        return pl.BlockSpec(shape, lambda b: (0,) * len(shape))

    # Whole-image blocks: at these sizes everything fits comfortably in default
    # scoped VMEM on v5e/v6e/v7x.
    # TODO(synk): for production H*W, add a second 'parallel' HW-tile grid axis
    # (two-pass softmax/InstanceNorm) and set vmem_limit_bytes explicitly so the
    # tiling also fits v7x's 64 MiB VMEM and keeps both TensorCores busy when B=1.
    y = pl.pallas_call(
        _make_block_kernel(H, W, Cm, Cm4),
        out_shape=jax.ShapeDtypeStruct((B, Cout, HW), f32),
        grid=(B,),
        in_specs=[
            pl.BlockSpec((1, Cin, HW), lambda b: (b, 0, 0)),
            full((Cm, Cin)), full((1, Cm)), full((Cm, 4)),
            full((Cm, Cm)), full((Cm, Cm)),
            full((Cm4, Cm)), full((9, Cm4, Cm4)), full((Cout, Cm4)),
        ],
        out_specs=pl.BlockSpec((1, Cout, HW), lambda b: (b, 0, 0)),
        compiler_params=pltpu.CompilerParams(dimension_semantics=("parallel",)),
    )(x, params["w_ex"], params["w_mask"], p_small,
      params["w_a1"], params["w_a2"],
      params["w_d1"], params["w_d2"], params["w_d3"])

    return y.reshape(B, Cout, H, W)


if __name__ == "__main__":
    B, Cin, H, W = 2, 4, 16, 16
    middle_channel = 16
    out_channel = 16  # residual `dc(out_gc) + out_gc` requires out_channel == middle_channel

    key = jax.random.PRNGKey(0)
    k_x, k_p = jax.random.split(key)
    x = jax.random.normal(k_x, (B, Cin, H, W), jnp.float32)
    params = init_params(k_p, Cin, middle_channel, out_channel)

    y = rn_msgcb_u2_v2(x, params)
    jax.block_until_ready(y)
    assert y.shape == (B, out_channel, H, W)
    assert bool(jnp.all(jnp.isfinite(y)))
    print("KERNEL_OK")
</pallas_src>

<mosaic_0001>
module attributes {stable_mosaic.version = 11 : i64} {
  func.func @kernel(%arg0: i32, %arg1: memref<1x4x256xf32, #tpu.memory_space<vmem>>, %arg2: memref<16x4xf32, #tpu.memory_space<vmem>>, %arg3: memref<1x16xf32, #tpu.memory_space<vmem>>, %arg4: memref<16x4xf32, #tpu.memory_space<vmem>>, %arg5: memref<16x16xf32, #tpu.memory_space<vmem>>, %arg6: memref<16x16xf32, #tpu.memory_space<vmem>>, %arg7: memref<4x16xf32, #tpu.memory_space<vmem>>, %arg8: memref<9x4x4xf32, #tpu.memory_space<vmem>>, %arg9: memref<16x4xf32, #tpu.memory_space<vmem>>, %arg10: memref<1x16x256xf32, #tpu.memory_space<vmem>>) attributes {dimension_semantics = [#tpu.dimension_semantics<parallel>], iteration_bounds = array<i64: 2>, scalar_prefetch = 0 : i64, scratch_operands = 0 : i64, tpu.core_type = #tpu.core_type<tc>, window_params = [{transform_indices = @transform_0, window_bounds = array<i64: 1, 4, 256>}, {pipeline_mode = #tpu.pipeline_mode<synchronous>, transform_indices = @transform_1, window_bounds = array<i64: 16, 4>}, {pipeline_mode = #tpu.pipeline_mode<synchronous>, transform_indices = @transform_2, window_bounds = array<i64: 1, 16>}, {pipeline_mode = #tpu.pipeline_mode<synchronous>, transform_indices = @transform_3, window_bounds = array<i64: 16, 4>}, {pipeline_mode = #tpu.pipeline_mode<synchronous>, transform_indices = @transform_4, window_bounds = array<i64: 16, 16>}, {pipeline_mode = #tpu.pipeline_mode<synchronous>, transform_indices = @transform_5, window_bounds = array<i64: 16, 16>}, {pipeline_mode = #tpu.pipeline_mode<synchronous>, transform_indices = @transform_6, window_bounds = array<i64: 4, 16>}, {pipeline_mode = #tpu.pipeline_mode<synchronous>, transform_indices = @transform_7, window_bounds = array<i64: 9, 4, 4>}, {pipeline_mode = #tpu.pipeline_mode<synchronous>, transform_indices = @transform_8, window_bounds = array<i64: 16, 4>}, {transform_indices = @transform_9, window_bounds = array<i64: 1, 16, 256>}]} {
    %cst = arith.constant 1.000000e+00 : f32
    %0 = vector.broadcast %cst : f32 to vector<1x256xf32>
    %c0 = arith.constant 0 : index
    %c0_0 = arith.constant 0 : index
    %c0_1 = arith.constant 0 : index
    %1 = vector.load %arg1[%c0, %c0_0, %c0_1] : memref<1x4x256xf32, #tpu.memory_space<vmem>>, vector<1x4x256xf32>
    %2 = vector.shape_cast %1 : vector<1x4x256xf32> to vector<4x256xf32>
    %c0_2 = arith.constant 0 : index
    %c0_3 = arith.constant 0 : index
    %3 = vector.load %arg2[%c0_2, %c0_3] : memref<16x4xf32, #tpu.memory_space<vmem>>, vector<16x4xf32>
    %cst_4 = arith.constant dense<0.000000e+00> : vector<16x256xf32>
    %4 = tpu.matmul %3, %2, %cst_4 {dimension_numbers = #tpu.dot_dimension_numbers<[1], [0], [0], [1], [0, 0, 1, 1], [], []>} : vector<16x4xf32>, vector<4x256xf32>, vector<16x256xf32> -> vector<16x256xf32>
    %c0_5 = arith.constant 0 : index
    %c0_6 = arith.constant 0 : index
    %5 = vector.load %arg3[%c0_5, %c0_6] : memref<1x16xf32, #tpu.memory_space<vmem>>, vector<1x16xf32>
    %cst_7 = arith.constant dense<0.000000e+00> : vector<1x256xf32>
    %6 = tpu.matmul %5, %4, %cst_7 {dimension_numbers = #tpu.dot_dimension_numbers<[1], [0], [0], [1], [0, 0, 1, 1], [], []>} : vector<1x16xf32>, vector<16x256xf32>, vector<1x256xf32> -> vector<1x256xf32>
    %cst_8 = arith.constant dense<0xFF800000> : vector<1xf32>
    %7 = vector.multi_reduction <maximumf>, %6, %cst_8 [1] : vector<1x256xf32> to vector<1xf32>
    %8 = vector.shape_cast %7 : vector<1xf32> to vector<1x1xf32>
    %9 = vector.broadcast %8 : vector<1x1xf32> to vector<1x256xf32>
    %10 = arith.subf %6, %9 : vector<1x256xf32>
    %11 = math.exp %10 : vector<1x256xf32>
    %cst_9 = arith.constant dense<0.000000e+00> : vector<1xf32>
    %12 = vector.multi_reduction <add>, %11, %cst_9 [1] : vector<1x256xf32> to vector<1xf32>
    %13 = vector.shape_cast %12 : vector<1xf32> to vector<1x1xf32>
    %14 = tpu.reciprocal %13 {approx = true} : vector<1x1xf32> -> vector<1x1xf32>
    %cst_10 = arith.constant dense<0.000000e+00> : vector<16x1xf32>
    %15 = tpu.matmul %4, %11, %cst_10 {dimension_numbers = #tpu.dot_dimension_numbers<[1], [1], [0], [0], [0, 0, 1, 0], [], []>} : vector<16x256xf32>, vector<1x256xf32>, vector<16x1xf32> -> vector<16x1xf32>
    %16 = vector.broadcast %14 : vector<1x1xf32> to vector<16x1xf32>
    %17 = arith.mulf %15, %16 : vector<16x1xf32>
    %c0_11 = arith.constant 0 : index
    %c0_12 = arith.constant 0 : index
    %18 = vector.load %arg4[%c0_11, %c0_12] : memref<16x4xf32, #tpu.memory_space<vmem>>, vector<16x1xf32>
    %c0_13 = arith.constant 0 : index
    %c1 = arith.constant 1 : index
    %19 = vector.load %arg4[%c0_13, %c1] : memref<16x4xf32, #tpu.memory_space<vmem>>, vector<16x1xf32>
    %c0_14 = arith.constant 0 : index
    %c2 = arith.constant 2 : index
    %20 = vector.load %arg4[%c0_14, %c2] : memref<16x4xf32, #tpu.memory_space<vmem>>, vector<16x1xf32>
    %c0_15 = arith.constant 0 : index
    %c3 = arith.constant 3 : index
    %21 = vector.load %arg4[%c0_15, %c3] : memref<16x4xf32, #tpu.memory_space<vmem>>, vector<16x1xf32>
    %c0_16 = arith.constant 0 : index
    %c0_17 = arith.constant 0 : index
    %22 = vector.load %arg5[%c0_16, %c0_17] : memref<16x16xf32, #tpu.memory_space<vmem>>, vector<16x16xf32>
    %cst_18 = arith.constant dense<0.000000e+00> : vector<16x1xf32>
    %23 = tpu.matmul %22, %17, %cst_18 {dimension_numbers = #tpu.dot_dimension_numbers<[1], [0], [0], [1], [0, 0, 1, 1], [], []>} : vector<16x16xf32>, vector<16x1xf32>, vector<16x1xf32> -> vector<16x1xf32>
    %24 = arith.addf %23, %18 : vector<16x1xf32>
    %cst_19 = arith.constant dense<0.000000e+00> : vector<1xf32>
    %25 = vector.multi_reduction <add>, %24, %cst_19 [0] : vector<16x1xf32> to vector<1xf32>
    %26 = vector.shape_cast %25 : vector<1xf32> to vector<1x1xf32>
    %cst_20 = arith.constant 1.600000e+01 : f32
    %27 = vector.broadcast %cst_20 : f32 to vector<1x1xf32>
    %28 = arith.divf %26, %27 : vector<1x1xf32>
    %29 = vector.broadcast %28 : vector<1x1xf32> to vector<16x1xf32>
    %30 = arith.subf %24, %29 : vector<16x1xf32>
    %31 = arith.mulf %30, %30 : vector<16x1xf32>
    %cst_21 = arith.constant dense<0.000000e+00> : vector<1xf32>
    %32 = vector.multi_reduction <add>, %31, %cst_21 [0] : vector<16x1xf32> to vector<1xf32>
    %33 = vector.shape_cast %32 : vector<1xf32> to vector<1x1xf32>
    %cst_22 = arith.constant 1.600000e+01 : f32
    %34 = vector.broadcast %cst_22 : f32 to vector<1x1xf32>
    %35 = arith.divf %33, %34 : vector<1x1xf32>
    %36 = vector.broadcast %28 : vector<1x1xf32> to vector<16x1xf32>
    %37 = arith.subf %24, %36 : vector<16x1xf32>
    %cst_23 = arith.constant 9.99999974E-6 : f32
    %38 = vector.broadcast %cst_23 : f32 to vector<1x1xf32>
    %39 = arith.addf %35, %38 : vector<1x1xf32>
    %40 = math.rsqrt %39 : vector<1x1xf32>
    %41 = vector.broadcast %40 : vector<1x1xf32> to vector<16x1xf32>
    %42 = arith.mulf %37, %41 : vector<16x1xf32>
    %43 = arith.mulf %42, %19 : vector<16x1xf32>
    %44 = arith.addf %43, %20 : vector<16x1xf32>
    %cst_24 = arith.constant 0.000000e+00 : f32
    %45 = vector.broadcast %cst_24 : f32 to vector<16x1xf32>
    %46 = arith.maximumf %44, %45 : vector<16x1xf32>
    %c0_25 = arith.constant 0 : index
    %c0_26 = arith.constant 0 : index
    %47 = vector.load %arg6[%c0_25, %c0_26] : memref<16x16xf32, #tpu.memory_space<vmem>>, vector<16x16xf32>
    %cst_27 = arith.constant dense<0.000000e+00> : vector<16x1xf32>
    %48 = tpu.matmul %47, %46, %cst_27 {dimension_numbers = #tpu.dot_dimension_numbers<[1], [0], [0], [1], [0, 0, 1, 1], [], []>} : vector<16x16xf32>, vector<16x1xf32>, vector<16x1xf32> -> vector<16x1xf32>
    %49 = arith.addf %48, %21 : vector<16x1xf32>
    %50 = vector.broadcast %49 : vector<16x1xf32> to vector<16x256xf32>
    %51 = arith.addf %4, %50 : vector<16x256xf32>
    %cst_28 = arith.constant dense<0.000000e+00> : vector<16xf32>
    %52 = vector.multi_reduction <add>, %51, %cst_28 [1] : vector<16x256xf32> to vector<16xf32>
    %53 = vector.shape_cast %52 : vector<16xf32> to vector<16x1xf32>
    %cst_29 = arith.constant 3.906250e-03 : f32
    %54 = vector.broadcast %cst_29 : f32 to vector<16x1xf32>
    %55 = arith.mulf %53, %54 : vector<16x1xf32>
    %56 = vector.broadcast %55 : vector<16x1xf32> to vector<16x256xf32>
    %57 = arith.subf %51, %56 : vector<16x256xf32>
    %cst_30 = arith.constant 0.000000e+00 : f32
    %58 = vector.broadcast %cst_30 : f32 to vector<16x256xf32>
    %59 = arith.maximumf %57, %58 : vector<16x256xf32>
    %cst_31 = arith.constant dense<0.000000e+00> : vector<1x16xf32>
    %60 = tpu.matmul %0, %51, %cst_31 {dimension_numbers = #tpu.dot_dimension_numbers<[1], [1], [0], [0], [0, 0, 1, 0], [], []>} : vector<1x256xf32>, vector<16x256xf32>, vector<1x16xf32> -> vector<1x16xf32>
    %61 = arith.mulf %51, %51 : vector<16x256xf32>
    %cst_32 = arith.constant dense<0.000000e+00> : vector<1x16xf32>
    %62 = tpu.matmul %0, %61, %cst_32 {dimension_numbers = #tpu.dot_dimension_numbers<[1], [1], [0], [0], [0, 0, 1, 0], [], []>} : vector<1x256xf32>, vector<16x256xf32>, vector<1x16xf32> -> vector<1x16xf32>
    %cst_33 = arith.constant 3.906250e-03 : f32
    %63 = vector.broadcast %cst_33 : f32 to vector<1x16xf32>
    %64 = arith.mulf %60, %63 : vector<1x16xf32>
    %cst_34 = arith.constant 3.906250e-03 : f32
    %65 = vector.broadcast %cst_34 : f32 to vector<1x16xf32>
    %66 = arith.mulf %62, %65 : vector<1x16xf32>
    %67 = arith.mulf %64, %64 : vector<1x16xf32>
    %68 = arith.subf %66, %67 : vector<1x16xf32>
    %cst_35 = arith.constant 0.000000e+00 : f32
    %69 = vector.broadcast %cst_35 : f32 to vector<1x16xf32>
    %70 = arith.maximumf %68, %69 : vector<1x16xf32>
    %cst_36 = arith.constant 9.99999974E-6 : f32
    %71 = vector.broadcast %cst_36 : f32 to vector<1x16xf32>
    %72 = arith.addf %70, %71 : vector<1x16xf32>
    %73 = math.rsqrt %72 : vector<1x16xf32>
    %c0_37 = arith.constant 0 : index
    %c0_38 = arith.constant 0 : index
    %74 = vector.load %arg7[%c0_37, %c0_38] : memref<4x16xf32, #tpu.memory_space<vmem>>, vector<4x16xf32>
    %75 = vector.broadcast %73 : vector<1x16xf32> to vector<4x16xf32>
    %76 = arith.mulf %74, %75 : vector<4x16xf32>
    %cst_39 = arith.constant dense<0.000000e+00> : vector<4x256xf32>
    %77 = tpu.matmul %76, %59, %cst_39 {dimension_numbers = #tpu.dot_dimension_numbers<[1], [0], [0], [1], [0, 0, 1, 1], [], []>} : vector<4x16xf32>, vector<16x256xf32>, vector<4x256xf32> -> vector<4x256xf32>
    %cst_40 = arith.constant dense<0.000000e+00> : vector<1x4xf32>
    %78 = tpu.matmul %0, %77, %cst_40 {dimension_numbers = #tpu.dot_dimension_numbers<[1], [1], [0], [0], [0, 0, 1, 0], [], []>} : vector<1x256xf32>, vector<4x256xf32>, vector<1x4xf32> -> vector<1x4xf32>
    %79 = arith.mulf %77, %77 : vector<4x256xf32>
    %cst_41 = arith.constant dense<0.000000e+00> : vector<1x4xf32>
    %80 = tpu.matmul %0, %79, %cst_41 {dimension_numbers = #tpu.dot_dimension_numbers<[1], [1], [0], [0], [0, 0, 1, 0], [], []>} : vector<1x256xf32>, vector<4x256xf32>, vector<1x4xf32> -> vector<1x4xf32>
    %cst_42 = arith.constant 3.906250e-03 : f32
    %81 = vector.broadcast %cst_42 : f32 to vector<1x4xf32>
    %82 = arith.mulf %78, %81 : vector<1x4xf32>
    %cst_43 = arith.constant 3.906250e-03 : f32
    %83 = vector.broadcast %cst_43 : f32 to vector<1x4xf32>
    %84 = arith.mulf %80, %83 : vector<1x4xf32>
    %85 = arith.mulf %82, %82 : vector<1x4xf32>
    %86 = arith.subf %84, %85 : vector<1x4xf32>
    %cst_44 = arith.constant 0.000000e+00 : f32
    %87 = vector.broadcast %cst_44 : f32 to vector<1x4xf32>
    %88 = arith.maximumf %86, %87 : vector<1x4xf32>
    %cst_45 = arith.constant 9.99999974E-6 : f32
    %89 = vector.broadcast %cst_45 : f32 to vector<1x4xf32>
    %90 = arith.addf %88, %89 : vector<1x4xf32>
    %91 = math.rsqrt %90 : vector<1x4xf32>
    %cst_46 = arith.constant 9.99999974E-6 : f32
    %92 = vector.broadcast %cst_46 : f32 to vector<1x4xf32>
    %93 = arith.addf %88, %92 : vector<1x4xf32>
    %94 = arith.divf %88, %93 : vector<1x4xf32>
    %cst_47 = arith.constant 9.99999974E-6 : f32
    %95 = vector.broadcast %cst_47 : f32 to vector<1x4xf32>
    %96 = arith.addf %94, %95 : vector<1x4xf32>
    %97 = math.rsqrt %96 : vector<1x4xf32>
    %98 = arith.mulf %91, %97 : vector<1x4xf32>
    %cst_48 = arith.constant dense<0.000000e+00> : vector<4xf32>
    %99 = vector.multi_reduction <add>, %77, %cst_48 [1] : vector<4x256xf32> to vector<4xf32>
    %100 = vector.shape_cast %99 : vector<4xf32> to vector<4x1xf32>
    %cst_49 = arith.constant 3.906250e-03 : f32
    %101 = vector.broadcast %cst_49 : f32 to vector<4x1xf32>
    %102 = arith.mulf %100, %101 : vector<4x1xf32>
    %103 = vector.broadcast %102 : vector<4x1xf32> to vector<4x256xf32>
    %104 = arith.subf %77, %103 : vector<4x256xf32>
    %cst_50 = arith.constant 0.000000e+00 : f32
    %105 = vector.broadcast %cst_50 : f32 to vector<4x256xf32>
    %106 = arith.maximumf %104, %105 : vector<4x256xf32>
    %cst_51 = arith.constant 0.000000e+00 : f32
    %107 = vector.broadcast %cst_51 : f32 to vector<4x128xf32>
    %108 = tpu.concatenate %107, %106, %107 in 1 : vector<4x128xf32>, vector<4x256xf32>, vector<4x128xf32> -> vector<4x512xf32>
    %109 = tpu.iota {dimensions = array<i32: 1>} : vector<1x256xi32>
    %c16_i32 = arith.constant 16 : i32
    %c0_i32 = arith.constant 0 : i32
    %110 = arith.cmpi eq, %c16_i32, %c0_i32 : i32
    %c1_i32 = arith.constant 1 : i32
    %111 = arith.select %110, %c1_i32, %c16_i32 : i32
    %112 = vector.broadcast %111 : i32 to vector<1x256xi32>
    %113 = arith.remsi %109, %112 : vector<1x256xi32>
    %c0_i32_52 = arith.constant 0 : i32
    %114 = vector.broadcast %c0_i32_52 : i32 to vector<1x256xi32>
    %115 = arith.cmpi ne, %113, %114 : vector<1x256xi32>
    %c0_i32_53 = arith.constant 0 : i32
    %116 = vector.broadcast %c0_i32_53 : i32 to vector<1x256xi32>
    %117 = arith.cmpi slt, %113, %116 : vector<1x256xi32>
    %c0_i32_54 = arith.constant 0 : i32
    %118 = arith.cmpi slt, %111, %c0_i32_54 : i32
    %119 = vector.broadcast %118 : i1 to vector<1x256xi1>
    %120 = vector.broadcast %119 : vector<1x256xi1> to vector<1x256xi1>
    %121 = arith.xori %117, %120 : vector<1x256xi1>
    %122 = arith.andi %121, %115 : vector<1x256xi1>
    %123 = vector.broadcast %111 : i32 to vector<1x256xi32>
    %124 = arith.addi %113, %123 : vector<1x256xi32>
    %125 = arith.select %122, %124, %113 : vector<1x256xi1>, vector<1x256xi32>
    %cst_55 = arith.constant 0.000000e+00 : f32
    %126 = vector.broadcast %cst_55 : f32 to vector<4x256xf32>
    %127 = vector.extract_strided_slice %108 {offsets = [0, 94], sizes = [4, 256], strides = [1, 1]} : vector<4x512xf32> to vector<4x256xf32>
    %c-2_i32 = arith.constant -2 : i32
    %128 = vector.broadcast %c-2_i32 : i32 to vector<1x256xi32>
    %129 = arith.addi %125, %128 : vector<1x256xi32>
    %c0_i32_56 = arith.constant 0 : i32
    %130 = vector.broadcast %c0_i32_56 : i32 to vector<1x256xi32>
    %131 = arith.cmpi sge, %129, %130 : vector<1x256xi32>
    %c-2_i32_57 = arith.constant -2 : i32
    %132 = vector.broadcast %c-2_i32_57 : i32 to vector<1x256xi32>
    %133 = arith.addi %125, %132 : vector<1x256xi32>
    %c16_i32_58 = arith.constant 16 : i32
    %134 = vector.broadcast %c16_i32_58 : i32 to vector<1x256xi32>
    %135 = arith.cmpi slt, %133, %134 : vector<1x256xi32>
    %136 = arith.andi %131, %135 : vector<1x256xi1>
    %cst_59 = arith.constant 0.000000e+00 : f32
    %137 = vector.shape_cast %136 : vector<1x256xi1> to vector<1x256xi1>
    %138 = vector.broadcast %137 : vector<1x256xi1> to vector<4x256xi1>
    %139 = vector.broadcast %cst_59 : f32 to vector<4x256xf32>
    %140 = arith.select %138, %127, %139 : vector<4x256xi1>, vector<4x256xf32>
    %c0_60 = arith.constant 0 : index
    %c0_61 = arith.constant 0 : index
    %c0_62 = arith.constant 0 : index
    %141 = vector.load %arg8[%c0_60, %c0_61, %c0_62] : memref<9x4x4xf32, #tpu.memory_space<vmem>>, vector<1x4x4xf32>
    %142 = vector.shape_cast %141 : vector<1x4x4xf32> to vector<4x4xf32>
    %143 = vector.broadcast %98 : vector<1x4xf32> to vector<4x4xf32>
    %144 = arith.mulf %142, %143 : vector<4x4xf32>
    %cst_63 = arith.constant dense<0.000000e+00> : vector<4x256xf32>
    %145 = tpu.matmul %144, %140, %cst_63 {dimension_numbers = #tpu.dot_dimension_numbers<[1], [0], [0], [1], [0, 0, 1, 1], [], []>} : vector<4x4xf32>, vector<4x256xf32>, vector<4x256xf32> -> vector<4x256xf32>
    %146 = arith.addf %126, %145 : vector<4x256xf32>
    %147 = vector.extract_strided_slice %108 {offsets = [0, 96], sizes = [4, 256], strides = [1, 1]} : vector<4x512xf32> to vector<4x256xf32>
    %c1_64 = arith.constant 1 : index
    %c0_65 = arith.constant 0 : index
    %c0_66 = arith.constant 0 : index
    %148 = vector.load %arg8[%c1_64, %c0_65, %c0_66] : memref<9x4x4xf32, #tpu.memory_space<vmem>>, vector<1x4x4xf32>
    %149 = vector.shape_cast %148 : vector<1x4x4xf32> to vector<4x4xf32>
    %150 = vector.broadcast %98 : vector<1x4xf32> to vector<4x4xf32>
    %151 = arith.mulf %149, %150 : vector<4x4xf32>
    %cst_67 = arith.constant dense<0.000000e+00> : vector<4x256xf32>
    %152 = tpu.matmul %151, %147, %cst_67 {dimension_numbers = #tpu.dot_dimension_numbers<[1], [0], [0], [1], [0, 0, 1, 1], [], []>} : vector<4x4xf32>, vector<4x256xf32>, vector<4x256xf32> -> vector<4x256xf32>
    %153 = arith.addf %146, %152 : vector<4x256xf32>
    %154 = vector.extract_strided_slice %108 {offsets = [0, 98], sizes = [4, 256], strides = [1, 1]} : vector<4x512xf32> to vector<4x256xf32>
    %c2_i32 = arith.constant 2 : i32
    %155 = vector.broadcast %c2_i32 : i32 to vector<1x256xi32>
    %156 = arith.addi %125, %155 : vector<1x256xi32>
    %c0_i32_68 = arith.constant 0 : i32
    %157 = vector.broadcast %c0_i32_68 : i32 to vector<1x256xi32>
    %158 = arith.cmpi sge, %156, %157 : vector<1x256xi32>
    %c2_i32_69 = arith.constant 2 : i32
    %159 = vector.broadcast %c2_i32_69 : i32 to vector<1x256xi32>
    %160 = arith.addi %125, %159 : vector<1x256xi32>
    %c16_i32_70 = arith.constant 16 : i32
    %161 = vector.broadcast %c16_i32_70 : i32 to vector<1x256xi32>
    %162 = arith.cmpi slt, %160, %161 : vector<1x256xi32>
    %163 = arith.andi %158, %162 : vector<1x256xi1>
    %cst_71 = arith.constant 0.000000e+00 : f32
    %164 = vector.shape_cast %163 : vector<1x256xi1> to vector<1x256xi1>
    %165 = vector.broadcast %164 : vector<1x256xi1> to vector<4x256xi1>
    %166 = vector.broadcast %cst_71 : f32 to vector<4x256xf32>
    %167 = arith.select %165, %154, %166 : vector<4x256xi1>, vector<4x256xf32>
    %c2_72 = arith.constant 2 : index
    %c0_73 = arith.constant 0 : index
    %c0_74 = arith.constant 0 : index
    %168 = vector.load %arg8[%c2_72, %c0_73, %c0_74] : memref<9x4x4xf32, #tpu.memory_space<vmem>>, vector<1x4x4xf32>
    %169 = vector.shape_cast %168 : vector<1x4x4xf32> to vector<4x4xf32>
    %170 = vector.broadcast %98 : vector<1x4xf32> to vector<4x4xf32>
    %171 = arith.mulf %169, %170 : vector<4x4xf32>
    %cst_75 = arith.constant dense<0.000000e+00> : vector<4x256xf32>
    %172 = tpu.matmul %171, %167, %cst_75 {dimension_numbers = #tpu.dot_dimension_numbers<[1], [0], [0], [1], [0, 0, 1, 1], [], []>} : vector<4x4xf32>, vector<4x256xf32>, vector<4x256xf32> -> vector<4x256xf32>
    %173 = arith.addf %153, %172 : vector<4x256xf32>
    %174 = vector.extract_strided_slice %108 {offsets = [0, 126], sizes = [4, 256], strides = [1, 1]} : vector<4x512xf32> to vector<4x256xf32>
    %c-2_i32_76 = arith.constant -2 : i32
    %175 = vector.broadcast %c-2_i32_76 : i32 to vector<1x256xi32>
    %176 = arith.addi %125, %175 : vector<1x256xi32>
    %c0_i32_77 = arith.constant 0 : i32
    %177 = vector.broadcast %c0_i32_77 : i32 to vector<1x256xi32>
    %178 = arith.cmpi sge, %176, %177 : vector<1x256xi32>
    %c-2_i32_78 = arith.constant -2 : i32
    %179 = vector.broadcast %c-2_i32_78 : i32 to vector<1x256xi32>
    %180 = arith.addi %125, %179 : vector<1x256xi32>
    %c16_i32_79 = arith.constant 16 : i32
    %181 = vector.broadcast %c16_i32_79 : i32 to vector<1x256xi32>
    %182 = arith.cmpi slt, %180, %181 : vector<1x256xi32>
    %183 = arith.andi %178, %182 : vector<1x256xi1>
    %cst_80 = arith.constant 0.000000e+00 : f32
    %184 = vector.shape_cast %183 : vector<1x256xi1> to vector<1x256xi1>
    %185 = vector.broadcast %184 : vector<1x256xi1> to vector<4x256xi1>
    %186 = vector.broadcast %cst_80 : f32 to vector<4x256xf32>
    %187 = arith.select %185, %174, %186 : vector<4x256xi1>, vector<4x256xf32>
    %c3_81 = arith.constant 3 : index
    %c0_82 = arith.constant 0 : index
    %c0_83 = arith.constant 0 : index
    %188 = vector.load %arg8[%c3_81, %c0_82, %c0_83] : memref<9x4x4xf32, #tpu.memory_space<vmem>>, vector<1x4x4xf32>
    %189 = vector.shape_cast %188 : vector<1x4x4xf32> to vector<4x4xf32>
    %190 = vector.broadcast %98 : vector<1x4xf32> to vector<4x4xf32>
    %191 = arith.mulf %189, %190 : vector<4x4xf32>
    %cst_84 = arith.constant dense<0.000000e+00> : vector<4x256xf32>
    %192 = tpu.matmul %191, %187, %cst_84 {dimension_numbers = #tpu.dot_dimension_numbers<[1], [0], [0], [1], [0, 0, 1, 1], [], []>} : vector<4x4xf32>, vector<4x256xf32>, vector<4x256xf32> -> vector<4x256xf32>
    %193 = arith.addf %173, %192 : vector<4x256xf32>
    %194 = vector.extract_strided_slice %108 {offsets = [0, 128], sizes = [4, 256], strides = [1, 1]} : vector<4x512xf32> to vector<4x256xf32>
    %c4 = arith.constant 4 : index
    %c0_85 = arith.constant 0 : index
    %c0_86 = arith.constant 0 : index
    %195 = vector.load %arg8[%c4, %c0_85, %c0_86] : memref<9x4x4xf32, #tpu.memory_space<vmem>>, vector<1x4x4xf32>
    %196 = vector.shape_cast %195 : vector<1x4x4xf32> to vector<4x4xf32>
    %197 = vector.broadcast %98 : vector<1x4xf32> to vector<4x4xf32>
    %198 = arith.mulf %196, %197 : vector<4x4xf32>
    %cst_87 = arith.constant dense<0.000000e+00> : vector<4x256xf32>
    %199 = tpu.matmul %198, %194, %cst_87 {dimension_numbers = #tpu.dot_dimension_numbers<[1], [0], [0], [1], [0, 0, 1, 1], [], []>} : vector<4x4xf32>, vector<4x256xf32>, vector<4x256xf32> -> vector<4x256xf32>
    %200 = arith.addf %193, %199 : vector<4x256xf32>
    %201 = vector.extract_strided_slice %108 {offsets = [0, 130], sizes = [4, 256], strides = [1, 1]} : vector<4x512xf32> to vector<4x256xf32>
    %c2_i32_88 = arith.constant 2 : i32
    %202 = vector.broadcast %c2_i32_88 : i32 to vector<1x256xi32>
    %203 = arith.addi %125, %202 : vector<1x256xi32>
    %c0_i32_89 = arith.constant 0 : i32
    %204 = vector.broadcast %c0_i32_89 : i32 to vector<1x256xi32>
    %205 = arith.cmpi sge, %203, %204 : vector<1x256xi32>
    %c2_i32_90 = arith.constant 2 : i32
    %206 = vector.broadcast %c2_i32_90 : i32 to vector<1x256xi32>
    %207 = arith.addi %125, %206 : vector<1x256xi32>
    %c16_i32_91 = arith.constant 16 : i32
    %208 = vector.broadcast %c16_i32_91 : i32 to vector<1x256xi32>
    %209 = arith.cmpi slt, %207, %208 : vector<1x256xi32>
    %210 = arith.andi %205, %209 : vector<1x256xi1>
    %cst_92 = arith.constant 0.000000e+00 : f32
    %211 = vector.shape_cast %210 : vector<1x256xi1> to vector<1x256xi1>
    %212 = vector.broadcast %211 : vector<1x256xi1> to vector<4x256xi1>
    %213 = vector.broadcast %cst_92 : f32 to vector<4x256xf32>
    %214 = arith.select %212, %201, %213 : vector<4x256xi1>, vector<4x256xf32>
    %c5 = arith.constant 5 : index
    %c0_93 = arith.constant 0 : index
    %c0_94 = arith.constant 0 : index
    %215 = vector.load %arg8[%c5, %c0_93, %c0_94] : memref<9x4x4xf32, #tpu.memory_space<vmem>>, vector<1x4x4xf32>
    %216 = vector.shape_cast %215 : vector<1x4x4xf32> to vector<4x4xf32>
    %217 = vector.broadcast %98 : vector<1x4xf32> to vector<4x4xf32>
    %218 = arith.mulf %216, %217 : vector<4x4xf32>
    %cst_95 = arith.constant dense<0.000000e+00> : vector<4x256xf32>
    %219 = tpu.matmul %218, %214, %cst_95 {dimension_numbers = #tpu.dot_dimension_numbers<[1], [0], [0], [1], [0, 0, 1, 1], [], []>} : vector<4x4xf32>, vector<4x256xf32>, vector<4x256xf32> -> vector<4x256xf32>
    %220 = arith.addf %200, %219 : vector<4x256xf32>
    %221 = vector.extract_strided_slice %108 {offsets = [0, 158], sizes = [4, 256], strides = [1, 1]} : vector<4x512xf32> to vector<4x256xf32>
    %c-2_i32_96 = arith.constant -2 : i32
    %222 = vector.broadcast %c-2_i32_96 : i32 to vector<1x256xi32>
    %223 = arith.addi %125, %222 : vector<1x256xi32>
    %c0_i32_97 = arith.constant 0 : i32
    %224 = vector.broadcast %c0_i32_97 : i32 to vector<1x256xi32>
    %225 = arith.cmpi sge, %223, %224 : vector<1x256xi32>
    %c-2_i32_98 = arith.constant -2 : i32
    %226 = vector.broadcast %c-2_i32_98 : i32 to vector<1x256xi32>
    %227 = arith.addi %125, %226 : vector<1x256xi32>
    %c16_i32_99 = arith.constant 16 : i32
    %228 = vector.broadcast %c16_i32_99 : i32 to vector<1x256xi32>
    %229 = arith.cmpi slt, %227, %228 : vector<1x256xi32>
    %230 = arith.andi %225, %229 : vector<1x256xi1>
    %cst_100 = arith.constant 0.000000e+00 : f32
    %231 = vector.shape_cast %230 : vector<1x256xi1> to vector<1x256xi1>
    %232 = vector.broadcast %231 : vector<1x256xi1> to vector<4x256xi1>
    %233 = vector.broadcast %cst_100 : f32 to vector<4x256xf32>
    %234 = arith.select %232, %221, %233 : vector<4x256xi1>, vector<4x256xf32>
    %c6 = arith.constant 6 : index
    %c0_101 = arith.constant 0 : index
    %c0_102 = arith.constant 0 : index
    %235 = vector.load %arg8[%c6, %c0_101, %c0_102] : memref<9x4x4xf32, #tpu.memory_space<vmem>>, vector<1x4x4xf32>
    %236 = vector.shape_cast %235 : vector<1x4x4xf32> to vector<4x4xf32>
    %237 = vector.broadcast %98 : vector<1x4xf32> to vector<4x4xf32>
    %238 = arith.mulf %236, %237 : vector<4x4xf32>
    %cst_103 = arith.constant dense<0.000000e+00> : vector<4x256xf32>
    %239 = tpu.matmul %238, %234, %cst_103 {dimension_numbers = #tpu.dot_dimension_numbers<[1], [0], [0], [1], [0, 0, 1, 1], [], []>} : vector<4x4xf32>, vector<4x256xf32>, vector<4x256xf32> -> vector<4x256xf32>
    %240 = arith.addf %220, %239 : vector<4x256xf32>
    %241 = vector.extract_strided_slice %108 {offsets = [0, 160], sizes = [4, 256], strides = [1, 1]} : vector<4x512xf32> to vector<4x256xf32>
    %c7 = arith.constant 7 : index
    %c0_104 = arith.constant 0 : index
    %c0_105 = arith.constant 0 : index
    %242 = vector.load %arg8[%c7, %c0_104, %c0_105] : memref<9x4x4xf32, #tpu.memory_space<vmem>>, vector<1x4x4xf32>
    %243 = vector.shape_cast %242 : vector<1x4x4xf32> to vector<4x4xf32>
    %244 = vector.broadcast %98 : vector<1x4xf32> to vector<4x4xf32>
    %245 = arith.mulf %243, %244 : vector<4x4xf32>
    %cst_106 = arith.constant dense<0.000000e+00> : vector<4x256xf32>
    %246 = tpu.matmul %245, %241, %cst_106 {dimension_numbers = #tpu.dot_dimension_numbers<[1], [0], [0], [1], [0, 0, 1, 1], [], []>} : vector<4x4xf32>, vector<4x256xf32>, vector<4x256xf32> -> vector<4x256xf32>
    %247 = arith.addf %240, %246 : vector<4x256xf32>
    %248 = vector.extract_strided_slice %108 {offsets = [0, 162], sizes = [4, 256], strides = [1, 1]} : vector<4x512xf32> to vector<4x256xf32>
    %c2_i32_107 = arith.constant 2 : i32
    %249 = vector.broadcast %c2_i32_107 : i32 to vector<1x256xi32>
    %250 = arith.addi %125, %249 : vector<1x256xi32>
    %c0_i32_108 = arith.constant 0 : i32
    %251 = vector.broadcast %c0_i32_108 : i32 to vector<1x256xi32>
    %252 = arith.cmpi sge, %250, %251 : vector<1x256xi32>
    %c2_i32_109 = arith.constant 2 : i32
    %253 = vector.broadcast %c2_i32_109 : i32 to vector<1x256xi32>
    %254 = arith.addi %125, %253 : vector<1x256xi32>
    %c16_i32_110 = arith.constant 16 : i32
    %255 = vector.broadcast %c16_i32_110 : i32 to vector<1x256xi32>
    %256 = arith.cmpi slt, %254, %255 : vector<1x256xi32>
    %257 = arith.andi %252, %256 : vector<1x256xi1>
    %cst_111 = arith.constant 0.000000e+00 : f32
    %258 = vector.shape_cast %257 : vector<1x256xi1> to vector<1x256xi1>
    %259 = vector.broadcast %258 : vector<1x256xi1> to vector<4x256xi1>
    %260 = vector.broadcast %cst_111 : f32 to vector<4x256xf32>
    %261 = arith.select %259, %248, %260 : vector<4x256xi1>, vector<4x256xf32>
    %c8 = arith.constant 8 : index
    %c0_112 = arith.constant 0 : index
    %c0_113 = arith.constant 0 : index
    %262 = vector.load %arg8[%c8, %c0_112, %c0_113] : memref<9x4x4xf32, #tpu.memory_space<vmem>>, vector<1x4x4xf32>
    %263 = vector.shape_cast %262 : vector<1x4x4xf32> to vector<4x4xf32>
    %264 = vector.broadcast %98 : vector<1x4xf32> to vector<4x4xf32>
    %265 = arith.mulf %263, %264 : vector<4x4xf32>
    %cst_114 = arith.constant dense<0.000000e+00> : vector<4x256xf32>
    %266 = tpu.matmul %265, %261, %cst_114 {dimension_numbers = #tpu.dot_dimension_numbers<[1], [0], [0], [1], [0, 0, 1, 1], [], []>} : vector<4x4xf32>, vector<4x256xf32>, vector<4x256xf32> -> vector<4x256xf32>
    %267 = arith.addf %247, %266 : vector<4x256xf32>
    %cst_115 = arith.constant dense<0.000000e+00> : vector<4xf32>
    %268 = vector.multi_reduction <add>, %267, %cst_115 [1] : vector<4x256xf32> to vector<4xf32>
    %269 = vector.shape_cast %268 : vector<4xf32> to vector<4x1xf32>
    %cst_116 = arith.constant 3.906250e-03 : f32
    %270 = vector.broadcast %cst_116 : f32 to vector<4x1xf32>
    %271 = arith.mulf %269, %270 : vector<4x1xf32>
    %272 = vector.broadcast %271 : vector<4x1xf32> to vector<4x256xf32>
    %273 = arith.subf %267, %272 : vector<4x256xf32>
    %cst_117 = arith.constant 0.000000e+00 : f32
    %274 = vector.broadcast %cst_117 : f32 to vector<4x256xf32>
    %275 = arith.maximumf %273, %274 : vector<4x256xf32>
    %cst_118 = arith.constant dense<0.000000e+00> : vector<1x4xf32>
    %276 = tpu.matmul %0, %267, %cst_118 {dimension_numbers = #tpu.dot_dimension_numbers<[1], [1], [0], [0], [0, 0, 1, 0], [], []>} : vector<1x256xf32>, vector<4x256xf32>, vector<1x4xf32> -> vector<1x4xf32>
    %277 = arith.mulf %267, %267 : vector<4x256xf32>
    %cst_119 = arith.constant dense<0.000000e+00> : vector<1x4xf32>
    %278 = tpu.matmul %0, %277, %cst_119 {dimension_numbers = #tpu.dot_dimension_numbers<[1], [1], [0], [0], [0, 0, 1, 0], [], []>} : vector<1x256xf32>, vector<4x256xf32>, vector<1x4xf32> -> vector<1x4xf32>
    %cst_120 = arith.constant 3.906250e-03 : f32
    %279 = vector.broadcast %cst_120 : f32 to vector<1x4xf32>
    %280 = arith.mulf %276, %279 : vector<1x4xf32>
    %cst_121 = arith.constant 3.906250e-03 : f32
    %281 = vector.broadcast %cst_121 : f32 to vector<1x4xf32>
    %282 = arith.mulf %278, %281 : vector<1x4xf32>
    %283 = arith.mulf %280, %280 : vector<1x4xf32>
    %284 = arith.subf %282, %283 : vector<1x4xf32>
    %cst_122 = arith.constant 0.000000e+00 : f32
    %285 = vector.broadcast %cst_122 : f32 to vector<1x4xf32>
    %286 = arith.maximumf %284, %285 : vector<1x4xf32>
    %cst_123 = arith.constant 9.99999974E-6 : f32
    %287 = vector.broadcast %cst_123 : f32 to vector<1x4xf32>
    %288 = arith.addf %286, %287 : vector<1x4xf32>
    %289 = math.rsqrt %288 : vector<1x4xf32>
    %c0_124 = arith.constant 0 : index
    %c0_125 = arith.constant 0 : index
    %290 = vector.load %arg9[%c0_124, %c0_125] : memref<16x4xf32, #tpu.memory_space<vmem>>, vector<16x4xf32>
    %291 = vector.broadcast %289 : vector<1x4xf32> to vector<16x4xf32>
    %292 = arith.mulf %290, %291 : vector<16x4xf32>
    %cst_126 = arith.constant dense<0.000000e+00> : vector<16x256xf32>
    %293 = tpu.matmul %292, %275, %cst_126 {dimension_numbers = #tpu.dot_dimension_numbers<[1], [0], [0], [1], [0, 0, 1, 1], [], []>} : vector<16x4xf32>, vector<4x256xf32>, vector<16x256xf32> -> vector<16x256xf32>
    %294 = arith.addf %293, %51 : vector<16x256xf32>
    %c0_127 = arith.constant 0 : index
    %c0_128 = arith.constant 0 : index
    %c0_129 = arith.constant 0 : index
    %295 = vector.load %arg10[%c0_127, %c0_128, %c0_129] : memref<1x16x256xf32, #tpu.memory_space<vmem>>, vector<1x16x256xf32>
    %296 = vector.shape_cast %295 : vector<1x16x256xf32> to vector<16x256xf32>
    %297 = vector.shape_cast %294 : vector<16x256xf32> to vector<1x16x256xf32>
    tpu.vector_store %arg10[%c0_127, %c0_128, %c0_129], %297 {strides = array<i32>} : memref<1x16x256xf32, #tpu.memory_space<vmem>>, vector<1x16x256xf32>,
    return
  }
  func.func @transform_0(%arg0: i32) -> (i32, i32, i32) {
    %c0_i32 = arith.constant 0 : i32
    %c0_i32_0 = arith.constant 0 : i32
    %c0_i32_1 = arith.constant 0 : i32
    return %arg0, %c0_i32, %c0_i32_0 : i32, i32, i32
  }
  func.func @transform_1(%arg0: i32) -> (i32, i32) {
    %c0_i32 = arith.constant 0 : i32
    %c0_i32_0 = arith.constant 0 : i32
    %c0_i32_1 = arith.constant 0 : i32
    return %c0_i32, %c0_i32_0 : i32, i32
  }
  func.func @transform_2(%arg0: i32) -> (i32, i32) {
    %c0_i32 = arith.constant 0 : i32
    %c0_i32_0 = arith.constant 0 : i32
    %c0_i32_1 = arith.constant 0 : i32
    return %c0_i32, %c0_i32_0 : i32, i32
  }
  func.func @transform_3(%arg0: i32) -> (i32, i32) {
    %c0_i32 = arith.constant 0 : i32
    %c0_i32_0 = arith.constant 0 : i32
    %c0_i32_1 = arith.constant 0 : i32
    return %c0_i32, %c0_i32_0 : i32, i32
  }
  func.func @transform_4(%arg0: i32) -> (i32, i32) {
    %c0_i32 = arith.constant 0 : i32
    %c0_i32_0 = arith.constant 0 : i32
    %c0_i32_1 = arith.constant 0 : i32
    return %c0_i32, %c0_i32_0 : i32, i32
  }
  func.func @transform_5(%arg0: i32) -> (i32, i32) {
    %c0_i32 = arith.constant 0 : i32
    %c0_i32_0 = arith.constant 0 : i32
    %c0_i32_1 = arith.constant 0 : i32
    return %c0_i32, %c0_i32_0 : i32, i32
  }
  func.func @transform_6(%arg0: i32) -> (i32, i32) {
    %c0_i32 = arith.constant 0 : i32
    %c0_i32_0 = arith.constant 0 : i32
    %c0_i32_1 = arith.constant 0 : i32
    return %c0_i32, %c0_i32_0 : i32, i32
  }
  func.func @transform_7(%arg0: i32) -> (i32, i32, i32) {
    %c0_i32 = arith.constant 0 : i32
    %c0_i32_0 = arith.constant 0 : i32
    %c0_i32_1 = arith.constant 0 : i32
    %c0_i32_2 = arith.constant 0 : i32
    return %c0_i32, %c0_i32_0, %c0_i32_1 : i32, i32, i32
  }
  func.func @transform_8(%arg0: i32) -> (i32, i32) {
    %c0_i32 = arith.constant 0 : i32
    %c0_i32_0 = arith.constant 0 : i32
    %c0_i32_1 = arith.constant 0 : i32
    return %c0_i32, %c0_i32_0 : i32, i32
  }
  func.func @transform_9(%arg0: i32) -> (i32, i32, i32) {
    %c0_i32 = arith.constant 0 : i32
    %c0_i32_0 = arith.constant 0 : i32
    %c0_i32_1 = arith.constant 0 : i32
    return %arg0, %c0_i32, %c0_i32_0 : i32, i32, i32
  }
}

</mosaic_0001>

<llo_original>
// kernel: rn_msgcb_u2_v2.1
$region0: #{rn_msgcb_u2_v2.1}
  #allocation0 [shape = 'u32[]', space=smem, size = 0x4, offset = 0x4, fixed_abs, tag = 'smem constant byte address 0x4 - core index']
  #allocation1 [shape = 'u32[144,128]{1,0:T(1,128)}', space=vmem, size = 0x12000, scoped, tag = 'internal scratch']
  %s0 = inlined_call_operand.vmem [shape: f32[2,4,256], index: 0, kind: input, shape index: {}]
  %s1 = inlined_call_operand.vmem [shape: f32[16,4], index: 1, kind: input, shape index: {}]
  %s2 = inlined_call_operand.vmem [shape: f32[1,16], index: 2, kind: input, shape index: {}]
  %s3 = inlined_call_operand.vmem [shape: f32[16,4], index: 3, kind: input, shape index: {}]
  %s4 = inlined_call_operand.vmem [shape: f32[16,16], index: 4, kind: input, shape index: {}]
  %s5 = inlined_call_operand.vmem [shape: f32[16,16], index: 5, kind: input, shape index: {}]
  %s6 = inlined_call_operand.vmem [shape: f32[4,16], index: 6, kind: input, shape index: {}]
  %s7 = inlined_call_operand.vmem [shape: f32[9,4,4], index: 7, kind: input, shape index: {}]
  %s8 = inlined_call_operand.vmem [shape: f32[16,4], index: 8, kind: input, shape index: {}]
  %s9 = inlined_call_operand.vmem [shape: f32[2,16,256], index: 9, kind: output, shape index: {}]
  %s10 = sld [smem:[#allocation0]]
  $region69: #{rn_msgcb_u2_v2.1} parent=0
    _
  %s12 = ssub.s32 1, %s10
  %s13 = scalar_select 0, %s12, %s10
  loop: start=0, step=1, limit=4
  $region2: #{rn_msgcb_u2_v2.1} parent=0 // loop_pre_header
    _
  $region3: #{rn_msgcb_u2_v2.1} parent=0 // loop_header
    %s15 = sphi 0, %s19
    %p16 = scmp.ge.s32.totalorder %s15, 4
    %s25 = sphi 0, %s27
    %s28 = sphi 0, %s25
    %s29 = sphi 0, %s28
    %s45 = sphi 0, %s29
    %s49 = sphi 0, %s49
    %s51 = sphi 0, %s49
    %s52 = sphi 0, %s51
    %s66 = sphi 0, %s52
    %s70 = sphi 0, %s70
    %s72 = sphi 0, %s70
    %s73 = sphi 0, %s72
    %s87 = sphi 0, %s73
    %s91 = sphi 0, %s91
    %s93 = sphi 0, %s91
    %s94 = sphi 0, %s93
    %s108 = sphi 0, %s94
    %s112 = sphi 0, %s112
    %s114 = sphi 0, %s112
    %s115 = sphi 0, %s114
    %s129 = sphi 0, %s115
    %s133 = sphi 0, %s133
    %s135 = sphi 0, %s133
    %s136 = sphi 0, %s135
    %s150 = sphi 0, %s136
    %s154 = sphi 0, %s154
    %s156 = sphi 0, %s154
    %s157 = sphi 0, %s156
    %s171 = sphi 0, %s157
    %s175 = sphi 0, %s175
    %s177 = sphi 0, %s175
    %s178 = sphi 0, %s177
    %s192 = sphi 0, %s178
    %s196 = sphi 0, %s196
    %s198 = sphi 0, %s196
    %s199 = sphi 0, %s198
    %s213 = sphi 0, %s199
    %s219 = sphi 0, %s221
    %s222 = sphi 0, %s219
    %s223 = sphi 0, %s222
    %s239 = sphi 0, %s223
  $region4: #{rn_msgcb_u2_v2.1} parent=0 // loop_header_branch
    %18 = sbr.rel (%p16) target = $region8
  $region5: #{rn_msgcb_u2_v2.1} parent=0 // loop_body
    %s20 = ssub.s32 %s15, 1
    %s21 = ssub.s32 %s15, 2
    %s22 = sadd.s32 %s15, 1
    %s23 = ssub.s32 %s15, %s22
    %p24 = scmp.eq.s32.totalorder %s23, 0
    %s26 = sadd.s32 %s25, 1
    %s27 = scalar_select %p24, %s25, %s26
    %p30 = pneg %p24
    %p31 = scmp.eq.s32.totalorder %s15, 1
    %p32 = por %p30, %p31
    %p33 = scmp.ne.s32.totalorder %s25, %s28
    %p34 = scmp.eq.s32.totalorder %s15, 0
    %p35 = por %p33, %p34
    %p36 = scmp.ne.s32.totalorder %s25, %s28
    %p37 = scmp.eq.s32.totalorder %s20, 1
    %p38 = por %p36, %p37
    %p39 = scmp.ne.s32.totalorder %s28, %s29
    %p40 = scmp.eq.s32.totalorder %s20, 0
    %p41 = por %p39, %p40
    %p42 = scmp.ne.s32.totalorder %s28, %s29
    %p43 = scmp.eq.s32.totalorder %s21, 1
    %p44 = por %p42, %p43
    %p46 = scmp.ne.s32.totalorder %s29, %s45
    %p47 = scmp.eq.s32.totalorder %s21, 0
    %p48 = por %p46, %p47
    %s50 = sadd.s32 %s49, 1
    %p53 = scmp.eq.s32.totalorder %s15, 1
    %p54 = scmp.ne.s32.totalorder %s49, %s51
    %p55 = scmp.eq.s32.totalorder %s15, 0
    %p56 = por %p54, %p55
    %p57 = scmp.ne.s32.totalorder %s49, %s51
    %p58 = scmp.eq.s32.totalorder %s20, 1
    %p59 = por %p57, %p58
    %p60 = scmp.ne.s32.totalorder %s51, %s52
    %p61 = scmp.eq.s32.totalorder %s20, 0
    %p62 = por %p60, %p61
    %p63 = scmp.ne.s32.totalorder %s51, %s52
    %p64 = scmp.eq.s32.totalorder %s21, 1
    %p65 = por %p63, %p64
    %p67 = scmp.ne.s32.totalorder %s52, %s66
    %p68 = scmp.eq.s32.totalorder %s21, 0
    %p69 = por %p67, %p68
    %s71 = sadd.s32 %s70, 1
    %p74 = scmp.eq.s32.totalorder %s15, 1
    %p75 = scmp.ne.s32.totalorder %s70, %s72
    %p76 = scmp.eq.s32.totalorder %s15, 0
    %p77 = por %p75, %p76
    %p78 = scmp.ne.s32.totalorder %s70, %s72
    %p79 = scmp.eq.s32.totalorder %s20, 1
    %p80 = por %p78, %p79
    %p81 = scmp.ne.s32.totalorder %s72, %s73
    %p82 = scmp.eq.s32.totalorder %s20, 0
    %p83 = por %p81, %p82
    %p84 = scmp.ne.s32.totalorder %s72, %s73
    %p85 = scmp.eq.s32.totalorder %s21, 1
    %p86 = por %p84, %p85
    %p88 = scmp.ne.s32.totalorder %s73, %s87
    %p89 = scmp.eq.s32.totalorder %s21, 0
    %p90 = por %p88, %p89
    %s92 = sadd.s32 %s91, 1
    %p95 = scmp.eq.s32.totalorder %s15, 1
    %p96 = scmp.ne.s32.totalorder %s91, %s93
    %p97 = scmp.eq.s32.totalorder %s15, 0
    %p98 = por %p96, %p97
    %p99 = scmp.ne.s32.totalorder %s91, %s93
    %p100 = scmp.eq.s32.totalorder %s20, 1
    %p101 = por %p99, %p100
    %p102 = scmp.ne.s32.totalorder %s93, %s94
    %p103 = scmp.eq.s32.totalorder %s20, 0
    %p104 = por %p102, %p103
    %p105 = scmp.ne.s32.totalorder %s93, %s94
    %p106 = scmp.eq.s32.totalorder %s21, 1
    %p107 = por %p105, %p106
    %p109 = scmp.ne.s32.totalorder %s94, %s108
    %p110 = scmp.eq.s32.totalorder %s21, 0
    %p111 = por %p109, %p110
    %s113 = sadd.s32 %s112, 1
    %p116 = scmp.eq.s32.totalorder %s15, 1
    %p117 = scmp.ne.s32.totalorder %s112, %s114
    %p118 = scmp.eq.s32.totalorder %s15, 0
    %p119 = por %p117, %p118
    %p120 = scmp.ne.s32.totalorder %s112, %s114
    %p121 = scmp.eq.s32.totalorder %s20, 1
    %p122 = por %p120, %p121
    %p123 = scmp.ne.s32.totalorder %s114, %s115
    %p124 = scmp.eq.s32.totalorder %s20, 0
    %p125 = por %p123, %p124
    %p126 = scmp.ne.s32.totalorder %s114, %s115
    %p127 = scmp.eq.s32.totalorder %s21, 1
    %p128 = por %p126, %p127
    %p130 = scmp.ne.s32.totalorder %s115, %s129
    %p131 = scmp.eq.s32.totalorder %s21, 0
    %p132 = por %p130, %p131
    %s134 = sadd.s32 %s133, 1
    %p137 = scmp.eq.s32.totalorder %s15, 1
    %p138 = scmp.ne.s32.totalorder %s133, %s135
    %p139 = scmp.eq.s32.totalorder %s15, 0
    %p140 = por %p138, %p139
    %p141 = scmp.ne.s32.totalorder %s133, %s135
    %p142 = scmp.eq.s32.totalorder %s20, 1
    %p143 = por %p141, %p142
    %p144 = scmp.ne.s32.totalorder %s135, %s136
    %p145 = scmp.eq.s32.totalorder %s20, 0
    %p146 = por %p144, %p145
    %p147 = scmp.ne.s32.totalorder %s135, %s136
    %p148 = scmp.eq.s32.totalorder %s21, 1
    %p149 = por %p147, %p148
    %p151 = scmp.ne.s32.totalorder %s136, %s150
    %p152 = scmp.eq.s32.totalorder %s21, 0
    %p153 = por %p151, %p152
    %s155 = sadd.s32 %s154, 1
    %p158 = scmp.eq.s32.totalorder %s15, 1
    %p159 = scmp.ne.s32.totalorder %s154, %s156
    %p160 = scmp.eq.s32.totalorder %s15, 0
    %p161 = por %p159, %p160
    %p162 = scmp.ne.s32.totalorder %s154, %s156
    %p163 = scmp.eq.s32.totalorder %s20, 1
    %p164 = por %p162, %p163
    %p165 = scmp.ne.s32.totalorder %s156, %s157
    %p166 = scmp.eq.s32.totalorder %s20, 0
    %p167 = por %p165, %p166
    %p168 = scmp.ne.s32.totalorder %s156, %s157
    %p169 = scmp.eq.s32.totalorder %s21, 1
    %p170 = por %p168, %p169
    %p172 = scmp.ne.s32.totalorder %s157, %s171
    %p173 = scmp.eq.s32.totalorder %s21, 0
    %p174 = por %p172, %p173
    %s176 = sadd.s32 %s175, 1
    %p179 = scmp.eq.s32.totalorder %s15, 1
    %p180 = scmp.ne.s32.totalorder %s175, %s177
    %p181 = scmp.eq.s32.totalorder %s15, 0
    %p182 = por %p180, %p181
    %p183 = scmp.ne.s32.totalorder %s175, %s177
    %p184 = scmp.eq.s32.totalorder %s20, 1
    %p185 = por %p183, %p184
    %p186 = scmp.ne.s32.totalorder %s177, %s178
    %p187 = scmp.eq.s32.totalorder %s20, 0
    %p188 = por %p186, %p187
    %p189 = scmp.ne.s32.totalorder %s177, %s178
    %p190 = scmp.eq.s32.totalorder %s21, 1
    %p191 = por %p189, %p190
    %p193 = scmp.ne.s32.totalorder %s178, %s192
    %p194 = scmp.eq.s32.totalorder %s21, 0
    %p195 = por %p193, %p194
    %s197 = sadd.s32 %s196, 1
    %p200 = scmp.eq.s32.totalorder %s15, 1
    %p201 = scmp.ne.s32.totalorder %s196, %s198
    %p202 = scmp.eq.s32.totalorder %s15, 0
    %p203 = por %p201, %p202
    %p204 = scmp.ne.s32.totalorder %s196, %s198
    %p205 = scmp.eq.s32.totalorder %s20, 1
    %p206 = por %p204, %p205
    %p207 = scmp.ne.s32.totalorder %s198, %s199
    %p208 = scmp.eq.s32.totalorder %s20, 0
    %p209 = por %p207, %p208
    %p210 = scmp.ne.s32.totalorder %s198, %s199
    %p211 = scmp.eq.s32.totalorder %s21, 1
    %p212 = por %p210, %p211
    %p214 = scmp.ne.s32.totalorder %s199, %s213
    %p215 = scmp.eq.s32.totalorder %s21, 0
    %p216 = por %p214, %p215
    %s217 = ssub.s32 %s15, %s22
    %p218 = scmp.eq.s32.totalorder %s217, 0
    %s220 = sadd.s32 %s219, 1
    %s221 = scalar_select %p218, %s219, %s220
    %p224 = pneg %p218
    %p225 = scmp.eq.s32.totalorder %s15, 1
    %p226 = por %p224, %p225
    %p227 = scmp.ne.s32.totalorder %s219, %s222
    %p228 = scmp.eq.s32.totalorder %s15, 0
    %p229 = por %p227, %p228
    %p230 = scmp.ne.s32.totalorder %s219, %s222
    %p231 = scmp.eq.s32.totalorder %s20, 1
    %p232 = por %p230, %p231
    %p233 = scmp.ne.s32.totalorder %s222, %s223
    %p234 = scmp.eq.s32.totalorder %s20, 0
    %p235 = por %p233, %p234
    %p236 = scmp.ne.s32.totalorder %s222, %s223
    %p237 = scmp.eq.s32.totalorder %s21, 1
    %p238 = por %p236, %p237
    %p240 = scmp.ne.s32.totalorder %s223, %s239
    %p241 = scmp.eq.s32.totalorder %s21, 0
    %p242 = por %p240, %p241
    %p243 = scmp.le.s32.totalorder 1, %s15
    %p244 = scmp.lt.s32.totalorder %s15, 3
    %p245 = pnand %p243, %p244
    %p246 = pneg %p245
    // Predicated region
    $region9: #{rn_msgcb_u2_v2.1} parent=5 // pred_check
      _
    $region10: #{rn_msgcb_u2_v2.1} parent=5 // pred_check_branch
      %248 = sbr.rel (%p245) target = $region12
    $region11: #{rn_msgcb_u2_v2.1} parent=5 // pred_region
      %s249 = ssub.s32 %s15, 1
      // Predicated region
      $region13: #{rn_msgcb_u2_v2.1} parent=11 // pred_check
        %p250 = pneg %p62
      $region14: #{rn_msgcb_u2_v2.1} parent=11 // pred_check_branch
        %252 = sbr.rel (%p250) target = $region16
      $region15: #{rn_msgcb_u2_v2.1} parent=11 // pred_region
        _
      $region16: #{rn_msgcb_u2_v2.1} parent=11 // pred_fallthru
        _
      // Predicated region
      $region17: #{rn_msgcb_u2_v2.1} parent=11 // pred_check
        %p253 = pneg %p83
      $region18: #{rn_msgcb_u2_v2.1} parent=11 // pred_check_branch
        %255 = sbr.rel (%p253) target = $region20
      $region19: #{rn_msgcb_u2_v2.1} parent=11 // pred_region
        _
      $region20: #{rn_msgcb_u2_v2.1} parent=11 // pred_fallthru
        _
      // Predicated region
      $region21: #{rn_msgcb_u2_v2.1} parent=11 // pred_check
        %p256 = pneg %p104
      $region22: #{rn_msgcb_u2_v2.1} parent=11 // pred_check_branch
        %258 = sbr.rel (%p256) target = $region24
      $region23: #{rn_msgcb_u2_v2.1} parent=11 // pred_region
        _
      $region24: #{rn_msgcb_u2_v2.1} parent=11 // pred_fallthru
        _
      // Predicated region
      $region25: #{rn_msgcb_u2_v2.1} parent=11 // pred_check
        %p259 = pneg %p125
      $region26: #{rn_msgcb_u2_v2.1} parent=11 // pred_check_branch
        %261 = sbr.rel (%p259) target = $region28
      $region27: #{rn_msgcb_u2_v2.1} parent=11 // pred_region
        _
      $region28: #{rn_msgcb_u2_v2.1} parent=11 // pred_fallthru
        _
      // Predicated region
      $region29: #{rn_msgcb_u2_v2.1} parent=11 // pred_check
        %p262 = pneg %p146
      $region30: #{rn_msgcb_u2_v2.1} parent=11 // pred_check_branch
        %264 = sbr.rel (%p262) target = $region32
      $region31: #{rn_msgcb_u2_v2.1} parent=11 // pred_region
        _
      $region32: #{rn_msgcb_u2_v2.1} parent=11 // pred_fallthru
        _
      // Predicated region
      $region33: #{rn_msgcb_u2_v2.1} parent=11 // pred_check
        %p265 = pneg %p167
      $region34: #{rn_msgcb_u2_v2.1} parent=11 // pred_check_branch
        %267 = sbr.rel (%p265) target = $region36
      $region35: #{rn_msgcb_u2_v2.1} parent=11 // pred_region
        _
      $region36: #{rn_msgcb_u2_v2.1} parent=11 // pred_fallthru
        _
      // Predicated region
      $region37: #{rn_msgcb_u2_v2.1} parent=11 // pred_check
        %p268 = pneg %p188
      $region38: #{rn_msgcb_u2_v2.1} parent=11 // pred_check_branch
        %270 = sbr.rel (%p268) target = $region40
      $region39: #{rn_msgcb_u2_v2.1} parent=11 // pred_region
        _
      $region40: #{rn_msgcb_u2_v2.1} parent=11 // pred_fallthru
        _
      // Predicated region
      $region41: #{rn_msgcb_u2_v2.1} parent=11 // pred_check
        %p271 = pneg %p209
      $region42: #{rn_msgcb_u2_v2.1} parent=11 // pred_check_branch
        %273 = sbr.rel (%p271) target = $region44
      $region43: #{rn_msgcb_u2_v2.1} parent=11 // pred_region
        _
      $region44: #{rn_msgcb_u2_v2.1} parent=11 // pred_fallthru
        _
    $region12: #{rn_msgcb_u2_v2.1} parent=5 // pred_fallthru
      _
    %p274 = scmp.lt.s32.totalorder %s15, 2
    // Predicated region
    $region45: #{rn_msgcb_u2_v2.1} parent=5 // pred_check
      %p275 = pneg %p274
    $region46: #{rn_msgcb_u2_v2.1} parent=5 // pred_check_branch
      %277 = sbr.rel (%p275) target = $region48
    $region47: #{rn_msgcb_u2_v2.1} parent=5 // pred_region
      // Predicated region
      $region49: #{rn_msgcb_u2_v2.1} parent=47 // pred_check
        %p278 = pneg %p35
      $region50: #{rn_msgcb_u2_v2.1} parent=47 // pred_check_branch
        %280 = sbr.rel (%p278) target = $region52
      $region51: #{rn_msgcb_u2_v2.1} parent=47 // pred_region
        %p281 = scmp.lt.s32.totalorder %s15, 1
        %s282 = scalar_select %p281, %s15, 1
        %s283 = smul.addr %s282, 2
        %s284 = smul.addr %s283, 4
        %s285 = scalar_lea.vmem %s0, %s284
      $region52: #{rn_msgcb_u2_v2.1} parent=47 // pred_fallthru
        _
    $region48: #{rn_msgcb_u2_v2.1} parent=5 // pred_fallthru
      _
    %p286 = scmp.le.s32.totalorder 1, %s15
    %p287 = scmp.lt.s32.totalorder %s15, 3
    %p288 = pnand %p286, %p287
    %p289 = pneg %p288
    // Predicated region
    $region53: #{rn_msgcb_u2_v2.1} parent=5 // pred_check
      _
    $region54: #{rn_msgcb_u2_v2.1} parent=5 // pred_check_branch
      %291 = sbr.rel (%p288) target = $region56
    $region55: #{rn_msgcb_u2_v2.1} parent=5 // pred_region
      %s292 = ssub.s32 %s15, 1
      %p293 = scmp.lt.s32.totalorder %s20, 1
      %s294 = scalar_select %p293, %s20, 1
      %s295 = smul.addr %s294, 2
      %s296 = smul.addr %s295, 4
      %s297 = scalar_lea.vmem %s0, %s296
      %p298 = pneg %p41
      %p299 = pneg %p38
      %p300 = pneg %p62
      %p301 = pneg %p59
      %p302 = pneg %p83
      %p303 = pneg %p80
      %p304 = pneg %p104
      %p305 = pneg %p101
      %p306 = pneg %p125
      %p307 = pneg %p122
      %p308 = pneg %p146
      %p309 = pneg %p143
      %p310 = pneg %p167
      %p311 = pneg %p164
      %p312 = pneg %p188
      %p313 = pneg %p185
      %p314 = pneg %p209
      %p315 = pneg %p206
      %p316 = pneg %p235
      %p317 = pneg %p232
      %p318 = scmp.lt.s32.totalorder %s20, 1
      %s319 = scalar_select %p318, %s20, 1
      %s320 = smul.addr %s319, 4
      %s321 = smul.addr %s320, 8
      %s322 = scalar_lea.vmem %s9, %s321
      %p323 = scmp.lt.s32.totalorder %s20, 1
      %s324 = scalar_select %p323, %s20, 1
      %s325 = smul.addr %s324, 2
      %s326 = smul.addr %s325, 4
      %s327 = scalar_lea.vmem %s0, %s326
      %p328 = scmp.lt.s32.totalorder %s20, 1
      %s329 = scalar_select %p328, %s20, 1
      %s330 = smul.addr %s329, 4
      %s331 = smul.addr %s330, 8
      %s332 = scalar_lea.vmem %s9, %s331
      %v333 = vld [vmem:[%s327] sm:$0xff]
      %v334 = vld [vmem:[%s1] sm:$0xff]
      %v335 = vld [vmem:[%s1 + $0x8] sm:$0xff]
      %v337 = vcombine.high %v333, %v333
      %vm338 = vcmask 31744
      %v340 = vsel %vm338, %v334, 0
      %v343 = vsel %vm338, %v335, 0
      %vm345 = vcmask 1043456
      %v346 = vsel %vm345, %v333, 0
      %v348 = vsel %vm345, %v337, 0
      %350 = vmatprep.subr.mxu0 0.0
      %351 = vmatpush1.msra.mxu0 0.0
      %352 = vmatprep.subr.mxu0 0.0
      %353 = vmatpush1.msra.mxu0 0.0
      %354 = vmatprep.subr.mxu0 0.0
      %355 = vmatpush1.msra.mxu0 0.0
      %356 = vmatprep.subr.mxu0 0.0
      %357 = vmatpush1.msra.mxu0 0.0
      %358 = vmatprep.subr.mxu0 0.0
      %359 = vmatpush1.msra.mxu0 0.0
      %360 = vmatprep.subr.mxu0 0.0
      %361 = vmatpush1.msra.mxu0 0.0
      %362 = vmatprep.subr.mxu0 0.0
      %363 = vmatpush1.msra.mxu0 0.0
      %364 = vmatprep.subr.mxu0 0.0
      %365 = vmatpush1.msra.mxu0 0.0
      %366 = vmatprep.subr.mxu0 0.0
      %367 = vmatpush1.msra.mxu0 0.0
      %368 = vmatprep.subr.mxu0 0.0
      %369 = vmatpush1.msra.mxu0 0.0
      %370 = vmatprep.subr.mxu0 0.0
      %371 = vmatpush1.msra.mxu0 0.0
      %372 = vmatprep.subr.mxu0 0.0
      %373 = vmatpush1.msra.mxu0 0.0
      %374 = vmatprep.subr.mxu0 0.0
      %375 = vmatpush1.msra.mxu0 0.0
      %376 = vmatprep.subr.mxu0 0.0
      %377 = vmatpush1.msra.mxu0 0.0
      %378 = vmatprep.subr.mxu0 0.0
      %379 = vmatpush1.msra.mxu0 0.0
      %380 = vmatprep.subr.mxu0 %v348
      %381 = vmatpush1.msra.mxu0 %v346
      %382 = vmatprep.subr.mxu0 0.0
      %383 = vmatpush2.msra.mxu0 0.0
      %384 = vmatprep.subr.mxu0 0.0
      %385 = vmatpush2.msra.mxu0 0.0
      %386 = vmatprep.subr.mxu0 0.0
      %387 = vmatpush2.msra.mxu0 0.0
      %388 = vmatprep.subr.mxu0 0.0
      %389 = vmatpush2.msra.mxu0 0.0
      %390 = vmatprep.subr.mxu0 0.0
      %391 = vmatpush2.msra.mxu0 0.0
      %392 = vmatprep.subr.mxu0 0.0
      %393 = vmatpush2.msra.mxu0 0.0
      %394 = vmatprep.subr.mxu0 0.0
      %395 = vmatpush2.msra.mxu0 0.0
      %396 = vmatprep.subr.mxu0 0.0
      %397 = vmatpush2.msra.mxu0 0.0
      %398 = vmatprep.subr.mxu0 0.0
      %399 = vmatpush2.msra.mxu0 0.0
      %400 = vmatprep.subr.mxu0 0.0
      %401 = vmatpush2.msra.mxu0 0.0
      %402 = vmatprep.subr.mxu0 0.0
      %403 = vmatpush2.msra.mxu0 0.0
      %404 = vmatprep.subr.mxu0 0.0
      %405 = vmatpush2.msra.mxu0 0.0
      %406 = vmatprep.subr.mxu0 0.0
      %407 = vmatpush2.msra.mxu0 0.0
      %408 = vmatprep.subr.mxu0 0.0
      %409 = vmatpush2.msra.mxu0 0.0
      %410 = vmatprep.subr.mxu0 0.0
      %411 = vmatpush2.msra.mxu0 0.0
      %412 = vmatprep.subr.mxu0 0.0
      %413 = vmatpush2.msra.mxu0 0.0
      %414 = vmatprep.mubr.f32.mxu0 0.0
      %415 = vmatmul.mubr.f32.gmra.mxu0 %v340
      %v416 = vpop.f32.mrf.mxu0
      %v417 = vadd.f32 0.0, %v416
      %v418 = vpop.f32.mrf.mxu0
      %v419 = vadd.f32 0.0, %v418
      %420 = vmatprep.mubr.f32.mxu0 0.0
      %421 = vmatmul.mubr.f32.gmra.mxu0 %v343
      %v422 = vpop.f32.mrf.mxu0
      %v423 = vadd.f32 0.0, %v422
      %v424 = vpop.f32.mrf.mxu0
      %v425 = vadd.f32 0.0, %v424
      %426 = vdwg.mxu0
      %v427 = vld [vmem:[%s2] sm:$0x1]
      %vm428 = vcmask 130048
      %v430 = vsel %vm428, %v427, 0
      %432 = vmatprep.subr.mxu0 0.0
      %433 = vmatpush1.msra.mxu0 0.0
      %434 = vmatprep.subr.mxu0 0.0
      %435 = vmatpush1.msra.mxu0 0.0
      %436 = vmatprep.subr.mxu0 0.0
      %437 = vmatpush1.msra.mxu0 0.0
      %438 = vmatprep.subr.mxu0 0.0
      %439 = vmatpush1.msra.mxu0 0.0
      %440 = vmatprep.subr.mxu0 0.0
      %441 = vmatpush1.msra.mxu0 0.0
      %442 = vmatprep.subr.mxu0 0.0
      %443 = vmatpush1.msra.mxu0 0.0
      %444 = vmatprep.subr.mxu0 0.0
      %445 = vmatpush1.msra.mxu0 0.0
      %446 = vmatprep.subr.mxu0 0.0
      %447 = vmatpush1.msra.mxu0 0.0
      %448 = vmatprep.subr.mxu0 0.0
      %449 = vmatpush1.msra.mxu0 0.0
      %450 = vmatprep.subr.mxu0 0.0
      %451 = vmatpush1.msra.mxu0 0.0
      %452 = vmatprep.subr.mxu0 0.0
      %453 = vmatpush1.msra.mxu0 0.0
      %454 = vmatprep.subr.mxu0 0.0
      %455 = vmatpush1.msra.mxu0 0.0
      %456 = vmatprep.subr.mxu0 0.0
      %457 = vmatpush1.msra.mxu0 0.0
      %458 = vmatprep.subr.mxu0 0.0
      %459 = vmatpush1.msra.mxu0 0.0
      %460 = vmatprep.subr.mxu0 %v425
      %461 = vmatpush1.msra.mxu0 %v423
      %462 = vmatprep.subr.mxu0 %v419
      %463 = vmatpush1.msra.mxu0 %v417
      %464 = vmatprep.subr.mxu0 0.0
      %465 = vmatpush2.msra.mxu0 0.0
      %466 = vmatprep.subr.mxu0 0.0
      %467 = vmatpush2.msra.mxu0 0.0
      %468 = vmatprep.subr.mxu0 0.0
      %469 = vmatpush2.msra.mxu0 0.0
      %470 = vmatprep.subr.mxu0 0.0
      %471 = vmatpush2.msra.mxu0 0.0
      %472 = vmatprep.subr.mxu0 0.0
      %473 = vmatpush2.msra.mxu0 0.0
      %474 = vmatprep.subr.mxu0 0.0
      %475 = vmatpush2.msra.mxu0 0.0
      %476 = vmatprep.subr.mxu0 0.0
      %477 = vmatpush2.msra.mxu0 0.0
      %478 = vmatprep.subr.mxu0 0.0
      %479 = vmatpush2.msra.mxu0 0.0
      %480 = vmatprep.subr.mxu0 0.0
      %481 = vmatpush2.msra.mxu0 0.0
      %482 = vmatprep.subr.mxu0 0.0
      %483 = vmatpush2.msra.mxu0 0.0
      %484 = vmatprep.subr.mxu0 0.0
      %485 = vmatpush2.msra.mxu0 0.0
      %486 = vmatprep.subr.mxu0 0.0
      %487 = vmatpush2.msra.mxu0 0.0
      %488 = vmatprep.subr.mxu0 0.0
      %489 = vmatpush2.msra.mxu0 0.0
      %490 = vmatprep.subr.mxu0 0.0
      %491 = vmatpush2.msra.mxu0 0.0
      %492 = vmatprep.subr.mxu0 0.0
      %493 = vmatpush2.msra.mxu0 0.0
      %494 = vmatprep.subr.mxu0 0.0
      %495 = vmatpush2.msra.mxu0 0.0
      %496 = vmatprep.mubr.f32.mxu0 0.0
      %497 = vmatmul.mubr.f32.gmra.mxu0 %v430
      %v498 = vpop.f32.mrf.mxu0
      %v499 = vadd.f32 0.0, %v498
      %v500 = vpop.f32.mrf.mxu0
      %v501 = vadd.f32 0.0, %v500
      %502 = vdwg.mxu0
      %vm503 = vcmask 1040384
      %v504 = vsel %vm503, %v499, -inf
      %v505 = vsel %vm503, %v501, -inf
      %v506 = vmax.f32 %v504, %v505
      %507 = vmax.xlane.f32.xlu0 %v506
      %v508 = vpop.xlane.xlu0 %507
      %v509 = vsub.f32 %v499, %v508
      %v510 = vsub.f32 %v501, %v508
      %v511 = vmul.f32 %v509, 1.442695
      %v512 = vpow.pop %v511
      %v513 = vmul.f32 %v510, 1.442695
      %v514 = vpow.pop %v513
      %v515 = vsel %vm503, %v512, 0.0
      %v516 = vsel %vm503, %v514, 0.0
      %v517 = vadd.f32 %v515, %v516
      %518 = vadd.xlane.f32.xlu0 %v517
      %v519 = vpop.xlane.xlu0 %518
      %v520 = vrcp.pop %v519
      %v521 = vlaneseq
      %v522 = vshrl.u32 %v521, 7
      %v523 = vsub.s32 0, %v522
      %v524 = vrot.slane %v512, %v523
      %v525 = vlaneseq
      %v526 = vshrl.u32 %v525, 7
      %v527 = vsub.s32 0, %v526
      %v528 = vrot.slane %v514, %v527
      %v529 = vmul.f32 %v417, %v524
      %v530 = vmul.f32 %v419, %v528
      %v531 = vmul.f32 %v423, %v524
      %v532 = vmul.f32 %v425, %v528
      %v533 = vadd.f32 %v529, %v530
      %534 = vadd.xlane.f32.xlu0 %v533
      %v535 = vpop.xlane.xlu0 %534
      %v536 = vadd.f32 %v531, %v532
      %537 = vadd.xlane.f32.xlu0 %v536
      %v538 = vpop.xlane.xlu0 %537
      %v539 = vlaneseq
      %v540 = vshrl.u32 %v539, 7
      %v541 = vsub.s32 0, %v540
      %v542 = vrot.slane %v520, %v541
      %v543 = vmul.f32 %v535, %v542
      %v544 = vmul.f32 %v538, %v542
      %v545 = vld [vmem:[%s3] sm:$0xff]
      %v546 = vld [vmem:[%s3 + $0x8] sm:$0xff]
      %v547 = vld [vmem:[%s4] sm:$0xff]
      %v548 = vld [vmem:[%s4 + $0x8] sm:$0xff]
      %v550 = vsel %vm428, %v547, 0
      %v553 = vsel %vm428, %v548, 0
      %555 = vmatprep.subr.mxu0 0.0
      %556 = vmatpush1.msra.mxu0 0.0
      %557 = vmatprep.subr.mxu0 0.0
      %558 = vmatpush1.msra.mxu0 0.0
      %559 = vmatprep.subr.mxu0 0.0
      %560 = vmatpush1.msra.mxu0 0.0
      %561 = vmatprep.subr.mxu0 0.0
      %562 = vmatpush1.msra.mxu0 0.0
      %563 = vmatprep.subr.mxu0 0.0
      %564 = vmatpush1.msra.mxu0 0.0
      %565 = vmatprep.subr.mxu0 0.0
      %566 = vmatpush1.msra.mxu0 0.0
      %567 = vmatprep.subr.mxu0 0.0
      %568 = vmatpush1.msra.mxu0 0.0
      %569 = vmatprep.subr.mxu0 0.0
      %570 = vmatpush1.msra.mxu0 0.0
      %571 = vmatprep.subr.mxu0 0.0
      %572 = vmatpush1.msra.mxu0 0.0
      %573 = vmatprep.subr.mxu0 0.0
      %574 = vmatpush1.msra.mxu0 0.0
      %575 = vmatprep.subr.mxu0 0.0
      %576 = vmatpush1.msra.mxu0 0.0
      %577 = vmatprep.subr.mxu0 0.0
      %578 = vmatpush1.msra.mxu0 0.0
      %579 = vmatprep.subr.mxu0 0.0
      %580 = vmatpush1.msra.mxu0 0.0
      %581 = vmatprep.subr.mxu0 0.0
      %582 = vmatpush1.msra.mxu0 0.0
      %583 = vmatprep.subr.mxu0 0.0
      %584 = vmatpush1.msra.mxu0 %v544
      %585 = vmatprep.subr.mxu0 0.0
      %586 = vmatpush1.msra.mxu0 %v543
      %587 = vmatprep.subr.mxu0 0.0
      %588 = vmatpush2.msra.mxu0 0.0
      %589 = vmatprep.subr.mxu0 0.0
      %590 = vmatpush2.msra.mxu0 0.0
      %591 = vmatprep.subr.mxu0 0.0
      %592 = vmatpush2.msra.mxu0 0.0
      %593 = vmatprep.subr.mxu0 0.0
      %594 = vmatpush2.msra.mxu0 0.0
      %595 = vmatprep.subr.mxu0 0.0
      %596 = vmatpush2.msra.mxu0 0.0
      %597 = vmatprep.subr.mxu0 0.0
      %598 = vmatpush2.msra.mxu0 0.0
      %599 = vmatprep.subr.mxu0 0.0
      %600 = vmatpush2.msra.mxu0 0.0
      %601 = vmatprep.subr.mxu0 0.0
      %602 = vmatpush2.msra.mxu0 0.0
      %603 = vmatprep.subr.mxu0 0.0
      %604 = vmatpush2.msra.mxu0 0.0
      %605 = vmatprep.subr.mxu0 0.0
      %606 = vmatpush2.msra.mxu0 0.0
      %607 = vmatprep.subr.mxu0 0.0
      %608 = vmatpush2.msra.mxu0 0.0
      %609 = vmatprep.subr.mxu0 0.0
      %610 = vmatpush2.msra.mxu0 0.0
      %611 = vmatprep.subr.mxu0 0.0
      %612 = vmatpush2.msra.mxu0 0.0
      %613 = vmatprep.subr.mxu0 0.0
      %614 = vmatpush2.msra.mxu0 0.0
      %615 = vmatprep.subr.mxu0 0.0
      %616 = vmatpush2.msra.mxu0 0.0
      %617 = vmatprep.subr.mxu0 0.0
      %618 = vmatpush2.msra.mxu0 0.0
      %619 = vmatprep.mubr.f32.mxu0 0.0
      %620 = vmatmul.mubr.f32.gmra.mxu0 %v550
      %v621 = vpop.f32.mrf.mxu0
      %v622 = vadd.f32 %v545, %v621
      %v623 = vpop.f32.mrf.mxu0
      %624 = vmatprep.mubr.f32.mxu0 0.0
      %625 = vmatmul.mubr.f32.gmra.mxu0 %v553
      %v626 = vpop.f32.mrf.mxu0
      %v627 = vadd.f32 %v546, %v626
      %v628 = vpop.f32.mrf.mxu0
      %629 = vdwg.mxu0
      %vm630 = vcmask 7168
      %v631 = vsel %vm630, %v622, 0.0
      %v632 = vsel %vm630, %v627, 0.0
      %v633 = vadd.f32 %v631, %v632
      %v634 = vrot.slane %v633, 4
      %v635 = vadd.f32 %v633, %v634
      %v636 = vrot.slane %v635, 2
      %v637 = vadd.f32 %v635, %v636
      %v638 = vrot.slane %v637, 1
      %v639 = vadd.f32 %v637, %v638
      %v640 = vrcp.pop 16.0
      %v641 = vmul.f32 %v639, %v640
      %v642 = vsub.f32 %v622, %v641
      %v643 = vsub.f32 %v627, %v641
      %v644 = vmul.f32 %v642, %v642
      %v645 = vmul.f32 %v643, %v643
      %v646 = vsel %vm630, %v644, 0.0
      %v647 = vsel %vm630, %v645, 0.0
      %v648 = vadd.f32 %v646, %v647
      %v649 = vrot.slane %v648, 4
      %v650 = vadd.f32 %v648, %v649
      %v651 = vrot.slane %v650, 2
      %v652 = vadd.f32 %v650, %v651
      %v653 = vrot.slane %v652, 1
      %v654 = vadd.f32 %v652, %v653
      %v655 = vmul.f32 %v654, %v640
      %v656 = vadd.f32 %v655, 1e-05
      %v657 = vrsqrt.pop %v656
      %v658 = vmul.f32 %v642, %v657
      %v659 = vmul.f32 %v643, %v657
      %662 = vrot.lane.b32.xlu0 %v545, 127
      %v663 = vpop.permute.xlu0 %662
      %664 = vrot.lane.b32.xlu0 %v546, 127
      %v665 = vpop.permute.xlu0 %664
      %v668 = vmul.f32 %v658, %v663
      %v669 = vmul.f32 %v659, %v665
      %670 = vrot.lane.b32.xlu0 %v545, 126
      %v671 = vpop.permute.xlu0 %670
      %672 = vrot.lane.b32.xlu0 %v546, 126
      %v673 = vpop.permute.xlu0 %672
      %v676 = vadd.f32 %v668, %v671
      %v677 = vadd.f32 %v669, %v673
      %v678 = vmax.f32 %v676, 0.0
      %v679 = vmax.f32 %v677, 0.0
      %v680 = vld [vmem:[%s5] sm:$0xff]
      %v681 = vld [vmem:[%s5 + $0x8] sm:$0xff]
      %682 = vrot.lane.b32.xlu0 %v545, 125
      %v683 = vpop.permute.xlu0 %682
      %684 = vrot.lane.b32.xlu0 %v546, 125
      %v685 = vpop.permute.xlu0 %684
      %v689 = vsel %vm428, %v680, 0
      %v692 = vsel %vm428, %v681, 0
      %694 = vmatprep.subr.mxu0 0.0
      %695 = vmatpush1.msra.mxu0 0.0
      %696 = vmatprep.subr.mxu0 0.0
      %697 = vmatpush1.msra.mxu0 0.0
      %698 = vmatprep.subr.mxu0 0.0
      %699 = vmatpush1.msra.mxu0 0.0
      %700 = vmatprep.subr.mxu0 0.0
      %701 = vmatpush1.msra.mxu0 0.0
      %702 = vmatprep.subr.mxu0 0.0
      %703 = vmatpush1.msra.mxu0 0.0
      %704 = vmatprep.subr.mxu0 0.0
      %705 = vmatpush1.msra.mxu0 0.0
      %706 = vmatprep.subr.mxu0 0.0
      %707 = vmatpush1.msra.mxu0 0.0
      %708 = vmatprep.subr.mxu0 0.0
      %709 = vmatpush1.msra.mxu0 0.0
      %710 = vmatprep.subr.mxu0 0.0
      %711 = vmatpush1.msra.mxu0 0.0
      %712 = vmatprep.subr.mxu0 0.0
      %713 = vmatpush1.msra.mxu0 0.0
      %714 = vmatprep.subr.mxu0 0.0
      %715 = vmatpush1.msra.mxu0 0.0
      %716 = vmatprep.subr.mxu0 0.0
      %717 = vmatpush1.msra.mxu0 0.0
      %718 = vmatprep.subr.mxu0 0.0
      %719 = vmatpush1.msra.mxu0 0.0
      %720 = vmatprep.subr.mxu0 0.0
      %721 = vmatpush1.msra.mxu0 0.0
      %722 = vmatprep.subr.mxu0 0.0
      %723 = vmatpush1.msra.mxu0 %v679
      %724 = vmatprep.subr.mxu0 0.0
      %725 = vmatpush1.msra.mxu0 %v678
      %726 = vmatprep.subr.mxu0 0.0
      %727 = vmatpush2.msra.mxu0 0.0
      %728 = vmatprep.subr.mxu0 0.0
      %729 = vmatpush2.msra.mxu0 0.0
      %730 = vmatprep.subr.mxu0 0.0
      %731 = vmatpush2.msra.mxu0 0.0
      %732 = vmatprep.subr.mxu0 0.0
      %733 = vmatpush2.msra.mxu0 0.0
      %734 = vmatprep.subr.mxu0 0.0
      %735 = vmatpush2.msra.mxu0 0.0
      %736 = vmatprep.subr.mxu0 0.0
      %737 = vmatpush2.msra.mxu0 0.0
      %738 = vmatprep.subr.mxu0 0.0
      %739 = vmatpush2.msra.mxu0 0.0
      %740 = vmatprep.subr.mxu0 0.0
      %741 = vmatpush2.msra.mxu0 0.0
      %742 = vmatprep.subr.mxu0 0.0
      %743 = vmatpush2.msra.mxu0 0.0
      %744 = vmatprep.subr.mxu0 0.0
      %745 = vmatpush2.msra.mxu0 0.0
      %746 = vmatprep.subr.mxu0 0.0
      %747 = vmatpush2.msra.mxu0 0.0
      %748 = vmatprep.subr.mxu0 0.0
      %749 = vmatpush2.msra.mxu0 0.0
      %750 = vmatprep.subr.mxu0 0.0
      %751 = vmatpush2.msra.mxu0 0.0
      %752 = vmatprep.subr.mxu0 0.0
      %753 = vmatpush2.msra.mxu0 0.0
      %754 = vmatprep.subr.mxu0 0.0
      %755 = vmatpush2.msra.mxu0 0.0
      %756 = vmatprep.subr.mxu0 0.0
      %757 = vmatpush2.msra.mxu0 0.0
      %758 = vmatprep.mubr.f32.mxu0 0.0
      %759 = vmatmul.mubr.f32.gmra.mxu0 %v689
      %v760 = vpop.f32.mrf.mxu0
      %v761 = vadd.f32 %v683, %v760
      %v762 = vpop.f32.mrf.mxu0
      %763 = vmatprep.mubr.f32.mxu0 0.0
      %764 = vmatmul.mubr.f32.gmra.mxu0 %v692
      %v765 = vpop.f32.mrf.mxu0
      %v766 = vadd.f32 %v685, %v765
      %v767 = vpop.f32.mrf.mxu0
      %768 = vdwg.mxu0
      %770 = vset.pattern.permute.xlu0 0
      %771 = vperm.xlu0 %770, %v761
      %v772 = vpop.permute.xlu0 %771
      %775 = vset.pattern.permute.xlu0 0
      %776 = vperm.xlu0 %775, %v766
      %v777 = vpop.permute.xlu0 %776
      %v779 = vadd.f32 %v417, %v772
      %v780 = vadd.f32 %v419, %v772
      %v781 = vadd.f32 %v423, %v777
      %v782 = vadd.f32 %v425, %v777
      %v783 = vadd.f32 %v779, %v780
      %784 = vadd.xlane.f32.xlu0 %v783
      %v785 = vpop.xlane.xlu0 %784
      %v786 = vadd.f32 %v781, %v782
      %787 = vadd.xlane.f32.xlu0 %v786
      %v788 = vpop.xlane.xlu0 %787
      %v789 = vmul.f32 %v785, 0.00390625
      %v790 = vmul.f32 %v788, 0.00390625
      %v791 = vsub.f32 %v779, %v789
      %v792 = vsub.f32 %v780, %v789
      %v793 = vsub.f32 %v781, %v790
      %v794 = vsub.f32 %v782, %v790
      %v795 = vmax.f32 %v791, 0.0
      %v796 = vmax.f32 %v792, 0.0
      %v797 = vmax.f32 %v793, 0.0
      %v798 = vmax.f32 %v794, 0.0
      %799 = vmatprep.subr.mxu0 0.0
      %800 = vmatpush1.xpose.msra.mxu0 0.0
      %801 = vmatprep.subr.mxu0 0.0
      %802 = vmatpush1.xpose.msra.mxu0 0.0
      %803 = vmatprep.subr.mxu0 0.0
      %804 = vmatpush1.xpose.msra.mxu0 0.0
      %805 = vmatprep.subr.mxu0 0.0
      %806 = vmatpush1.xpose.msra.mxu0 0.0
      %807 = vmatprep.subr.mxu0 0.0
      %808 = vmatpush1.xpose.msra.mxu0 0.0
      %809 = vmatprep.subr.mxu0 0.0
      %810 = vmatpush1.xpose.msra.mxu0 0.0
      %811 = vmatprep.subr.mxu0 0.0
      %812 = vmatpush1.xpose.msra.mxu0 0.0
      %813 = vmatprep.subr.mxu0 0.0
      %814 = vmatpush1.xpose.msra.mxu0 0.0
      %815 = vmatprep.subr.mxu0 0.0
      %816 = vmatpush1.xpose.msra.mxu0 0.0
      %817 = vmatprep.subr.mxu0 0.0
      %818 = vmatpush1.xpose.msra.mxu0 0.0
      %819 = vmatprep.subr.mxu0 0.0
      %820 = vmatpush1.xpose.msra.mxu0 0.0
      %821 = vmatprep.subr.mxu0 0.0
      %822 = vmatpush1.xpose.msra.mxu0 0.0
      %823 = vmatprep.subr.mxu0 0.0
      %824 = vmatpush1.xpose.msra.mxu0 0.0
      %825 = vmatprep.subr.mxu0 0.0
      %826 = vmatpush1.xpose.msra.mxu0 0.0
      %827 = vmatprep.subr.mxu0 %v782
      %828 = vmatpush1.xpose.msra.mxu0 %v781
      %829 = vmatprep.subr.mxu0 %v780
      %830 = vmatpush1.xpose.msra.mxu0 %v779
      %831 = vmatprep.subr.mxu0 0.0
      %832 = vmatpush2.xpose.msra.mxu0 0.0
      %833 = vmatprep.subr.mxu0 0.0
      %834 = vmatpush2.xpose.msra.mxu0 0.0
      %835 = vmatprep.subr.mxu0 0.0
      %836 = vmatpush2.xpose.msra.mxu0 0.0
      %837 = vmatprep.subr.mxu0 0.0
      %838 = vmatpush2.xpose.msra.mxu0 0.0
      %839 = vmatprep.subr.mxu0 0.0
      %840 = vmatpush2.xpose.msra.mxu0 0.0
      %841 = vmatprep.subr.mxu0 0.0
      %842 = vmatpush2.xpose.msra.mxu0 0.0
      %843 = vmatprep.subr.mxu0 0.0
      %844 = vmatpush2.xpose.msra.mxu0 0.0
      %845 = vmatprep.subr.mxu0 0.0
      %846 = vmatpush2.xpose.msra.mxu0 0.0
      %847 = vmatprep.subr.mxu0 0.0
      %848 = vmatpush2.xpose.msra.mxu0 0.0
      %849 = vmatprep.subr.mxu0 0.0
      %850 = vmatpush2.xpose.msra.mxu0 0.0
      %851 = vmatprep.subr.mxu0 0.0
      %852 = vmatpush2.xpose.msra.mxu0 0.0
      %853 = vmatprep.subr.mxu0 0.0
      %854 = vmatpush2.xpose.msra.mxu0 0.0
      %855 = vmatprep.subr.mxu0 0.0
      %856 = vmatpush2.xpose.msra.mxu0 0.0
      %857 = vmatprep.subr.mxu0 0.0
      %858 = vmatpush2.xpose.msra.mxu0 0.0
      %859 = vmatprep.subr.mxu0 0.0
      %860 = vmatpush2.xpose.msra.mxu0 0.0
      %861 = vmatprep.subr.mxu0 0.0
      %862 = vmatpush2.xpose.msra.mxu0 0.0
      %863 = vmatprep.mubr.f32.mxu0 1.0
      %864 = vmatmul.mubr.f32.gmra.mxu0 1.0
      %v865 = vpop.f32.mrf.mxu0
      %v866 = vadd.f32 0.0, %v865
      %v867 = vpop.f32.mrf.mxu0
      %868 = vdwg.mxu0
      %v869 = vmul.f32 %v779, %v779
      %v870 = vmul.f32 %v780, %v780
      %v871 = vmul.f32 %v781, %v781
      %v872 = vmul.f32 %v782, %v782
      %873 = vmatprep.subr.mxu0 0.0
      %874 = vmatpush1.xpose.msra.mxu0 0.0
      %875 = vmatprep.subr.mxu0 0.0
      %876 = vmatpush1.xpose.msra.mxu0 0.0
      %877 = vmatprep.subr.mxu0 0.0
      %878 = vmatpush1.xpose.msra.mxu0 0.0
      %879 = vmatprep.subr.mxu0 0.0
      %880 = vmatpush1.xpose.msra.mxu0 0.0
      %881 = vmatprep.subr.mxu0 0.0
      %882 = vmatpush1.xpose.msra.mxu0 0.0
      %883 = vmatprep.subr.mxu0 0.0
      %884 = vmatpush1.xpose.msra.mxu0 0.0
      %885 = vmatprep.subr.mxu0 0.0
      %886 = vmatpush1.xpose.msra.mxu0 0.0
      %887 = vmatprep.subr.mxu0 0.0
      %888 = vmatpush1.xpose.msra.mxu0 0.0
      %889 = vmatprep.subr.mxu0 0.0
      %890 = vmatpush1.xpose.msra.mxu0 0.0
      %891 = vmatprep.subr.mxu0 0.0
      %892 = vmatpush1.xpose.msra.mxu0 0.0
      %893 = vmatprep.subr.mxu0 0.0
      %894 = vmatpush1.xpose.msra.mxu0 0.0
      %895 = vmatprep.subr.mxu0 0.0
      %896 = vmatpush1.xpose.msra.mxu0 0.0
      %897 = vmatprep.subr.mxu0 0.0
      %898 = vmatpush1.xpose.msra.mxu0 0.0
      %899 = vmatprep.subr.mxu0 0.0
      %900 = vmatpush1.xpose.msra.mxu0 0.0
      %901 = vmatprep.subr.mxu0 %v872
      %902 = vmatpush1.xpose.msra.mxu0 %v871
      %903 = vmatprep.subr.mxu0 %v870
      %904 = vmatpush1.xpose.msra.mxu0 %v869
      %905 = vmatprep.subr.mxu0 0.0
      %906 = vmatpush2.xpose.msra.mxu0 0.0
      %907 = vmatprep.subr.mxu0 0.0
      %908 = vmatpush2.xpose.msra.mxu0 0.0
      %909 = vmatprep.subr.mxu0 0.0
      %910 = vmatpush2.xpose.msra.mxu0 0.0
      %911 = vmatprep.subr.mxu0 0.0
      %912 = vmatpush2.xpose.msra.mxu0 0.0
      %913 = vmatprep.subr.mxu0 0.0
      %914 = vmatpush2.xpose.msra.mxu0 0.0
      %915 = vmatprep.subr.mxu0 0.0
      %916 = vmatpush2.xpose.msra.mxu0 0.0
      %917 = vmatprep.subr.mxu0 0.0
      %918 = vmatpush2.xpose.msra.mxu0 0.0
      %919 = vmatprep.subr.mxu0 0.0
      %920 = vmatpush2.xpose.msra.mxu0 0.0
      %921 = vmatprep.subr.mxu0 0.0
      %922 = vmatpush2.xpose.msra.mxu0 0.0
      %923 = vmatprep.subr.mxu0 0.0
      %924 = vmatpush2.xpose.msra.mxu0 0.0
      %925 = vmatprep.subr.mxu0 0.0
      %926 = vmatpush2.xpose.msra.mxu0 0.0
      %927 = vmatprep.subr.mxu0 0.0
      %928 = vmatpush2.xpose.msra.mxu0 0.0
      %929 = vmatprep.subr.mxu0 0.0
      %930 = vmatpush2.xpose.msra.mxu0 0.0
      %931 = vmatprep.subr.mxu0 0.0
      %932 = vmatpush2.xpose.msra.mxu0 0.0
      %933 = vmatprep.subr.mxu0 0.0
      %934 = vmatpush2.xpose.msra.mxu0 0.0
      %935 = vmatprep.subr.mxu0 0.0
      %936 = vmatpush2.xpose.msra.mxu0 0.0
      %937 = vmatprep.mubr.f32.mxu0 1.0
      %938 = vmatmul.mubr.f32.gmra.mxu0 1.0
      %v939 = vpop.f32.mrf.mxu0
      %v940 = vadd.f32 0.0, %v939
      %v941 = vpop.f32.mrf.mxu0
      %942 = vdwg.mxu0
      %v943 = vmul.f32 %v866, 0.00390625
      %v944 = vmul.f32 %v940, 0.00390625
      %v945 = vmul.f32 %v943, %v943
      %v946 = vsub.f32 %v944, %v945
      %v947 = vmax.f32 %v946, 0.0
      %v948 = vadd.f32 %v947, 1e-05
      %v949 = vrsqrt.pop %v948
      %v950 = vld [vmem:[%s6] sm:$0xf]
      %v951 = vlaneseq
      %v952 = vshrl.u32 %v951, 7
      %v953 = vsub.s32 0, %v952
      %v954 = vrot.slane %v949, %v953
      %v955 = vmul.f32 %v950, %v954
      %v957 = vsel %vm428, %v955, 0
      %959 = vmatprep.subr.mxu0 0.0
      %960 = vmatpush1.msra.mxu0 0.0
      %961 = vmatprep.subr.mxu0 0.0
      %962 = vmatpush1.msra.mxu0 0.0
      %963 = vmatprep.subr.mxu0 0.0
      %964 = vmatpush1.msra.mxu0 0.0
      %965 = vmatprep.subr.mxu0 0.0
      %966 = vmatpush1.msra.mxu0 0.0
      %967 = vmatprep.subr.mxu0 0.0
      %968 = vmatpush1.msra.mxu0 0.0
      %969 = vmatprep.subr.mxu0 0.0
      %970 = vmatpush1.msra.mxu0 0.0
      %971 = vmatprep.subr.mxu0 0.0
      %972 = vmatpush1.msra.mxu0 0.0
      %973 = vmatprep.subr.mxu0 0.0
      %974 = vmatpush1.msra.mxu0 0.0
      %975 = vmatprep.subr.mxu0 0.0
      %976 = vmatpush1.msra.mxu0 0.0
      %977 = vmatprep.subr.mxu0 0.0
      %978 = vmatpush1.msra.mxu0 0.0
      %979 = vmatprep.subr.mxu0 0.0
      %980 = vmatpush1.msra.mxu0 0.0
      %981 = vmatprep.subr.mxu0 0.0
      %982 = vmatpush1.msra.mxu0 0.0
      %983 = vmatprep.subr.mxu0 0.0
      %984 = vmatpush1.msra.mxu0 0.0
      %985 = vmatprep.subr.mxu0 0.0
      %986 = vmatpush1.msra.mxu0 0.0
      %987 = vmatprep.subr.mxu0 %v798
      %988 = vmatpush1.msra.mxu0 %v797
      %989 = vmatprep.subr.mxu0 %v796
      %990 = vmatpush1.msra.mxu0 %v795
      %991 = vmatprep.subr.mxu0 0.0
      %992 = vmatpush2.msra.mxu0 0.0
      %993 = vmatprep.subr.mxu0 0.0
      %994 = vmatpush2.msra.mxu0 0.0
      %995 = vmatprep.subr.mxu0 0.0
      %996 = vmatpush2.msra.mxu0 0.0
      %997 = vmatprep.subr.mxu0 0.0
      %998 = vmatpush2.msra.mxu0 0.0
      %999 = vmatprep.subr.mxu0 0.0
      %1000 = vmatpush2.msra.mxu0 0.0
      %1001 = vmatprep.subr.mxu0 0.0
      %1002 = vmatpush2.msra.mxu0 0.0
      %1003 = vmatprep.subr.mxu0 0.0
      %1004 = vmatpush2.msra.mxu0 0.0
      %1005 = vmatprep.subr.mxu0 0.0
      %1006 = vmatpush2.msra.mxu0 0.0
      %1007 = vmatprep.subr.mxu0 0.0
      %1008 = vmatpush2.msra.mxu0 0.0
      %1009 = vmatprep.subr.mxu0 0.0
      %1010 = vmatpush2.msra.mxu0 0.0
      %1011 = vmatprep.subr.mxu0 0.0
      %1012 = vmatpush2.msra.mxu0 0.0
      %1013 = vmatprep.subr.mxu0 0.0
      %1014 = vmatpush2.msra.mxu0 0.0
      %1015 = vmatprep.subr.mxu0 0.0
      %1016 = vmatpush2.msra.mxu0 0.0
      %1017 = vmatprep.subr.mxu0 0.0
      %1018 = vmatpush2.msra.mxu0 0.0
      %1019 = vmatprep.subr.mxu0 0.0
      %1020 = vmatpush2.msra.mxu0 0.0
      %1021 = vmatprep.subr.mxu0 0.0
      %1022 = vmatpush2.msra.mxu0 0.0
      %1023 = vmatprep.mubr.f32.mxu0 0.0
      %1024 = vmatmul.mubr.f32.gmra.mxu0 %v957
      %v1025 = vpop.f32.mrf.mxu0
      %v1026 = vadd.f32 0.0, %v1025
      %v1027 = vpop.f32.mrf.mxu0
      %v1028 = vadd.f32 0.0, %v1027
      %1029 = vdwg.mxu0
      %1030 = vmatprep.subr.mxu0 0.0
      %1031 = vmatpush1.xpose.msra.mxu0 0.0
      %1032 = vmatprep.subr.mxu0 0.0
      %1033 = vmatpush1.xpose.msra.mxu0 0.0
      %1034 = vmatprep.subr.mxu0 0.0
      %1035 = vmatpush1.xpose.msra.mxu0 0.0
      %1036 = vmatprep.subr.mxu0 0.0
      %1037 = vmatpush1.xpose.msra.mxu0 0.0
      %1038 = vmatprep.subr.mxu0 0.0
      %1039 = vmatpush1.xpose.msra.mxu0 0.0
      %1040 = vmatprep.subr.mxu0 0.0
      %1041 = vmatpush1.xpose.msra.mxu0 0.0
      %1042 = vmatprep.subr.mxu0 0.0
      %1043 = vmatpush1.xpose.msra.mxu0 0.0
      %1044 = vmatprep.subr.mxu0 0.0
      %1045 = vmatpush1.xpose.msra.mxu0 0.0
      %1046 = vmatprep.subr.mxu0 0.0
      %1047 = vmatpush1.xpose.msra.mxu0 0.0
      %1048 = vmatprep.subr.mxu0 0.0
      %1049 = vmatpush1.xpose.msra.mxu0 0.0
      %1050 = vmatprep.subr.mxu0 0.0
      %1051 = vmatpush1.xpose.msra.mxu0 0.0
      %1052 = vmatprep.subr.mxu0 0.0
      %1053 = vmatpush1.xpose.msra.mxu0 0.0
      %1054 = vmatprep.subr.mxu0 0.0
      %1055 = vmatpush1.xpose.msra.mxu0 0.0
      %1056 = vmatprep.subr.mxu0 0.0
      %1057 = vmatpush1.xpose.msra.mxu0 0.0
      %1058 = vmatprep.subr.mxu0 0.0
      %1059 = vmatpush1.xpose.msra.mxu0 0.0
      %1060 = vmatprep.subr.mxu0 %v1028
      %1061 = vmatpush1.xpose.msra.mxu0 %v1026
      %1062 = vmatprep.subr.mxu0 0.0
      %1063 = vmatpush2.xpose.msra.mxu0 0.0
      %1064 = vmatprep.subr.mxu0 0.0
      %1065 = vmatpush2.xpose.msra.mxu0 0.0
      %1066 = vmatprep.subr.mxu0 0.0
      %1067 = vmatpush2.xpose.msra.mxu0 0.0
      %1068 = vmatprep.subr.mxu0 0.0
      %1069 = vmatpush2.xpose.msra.mxu0 0.0
      %1070 = vmatprep.subr.mxu0 0.0
      %1071 = vmatpush2.xpose.msra.mxu0 0.0
      %1072 = vmatprep.subr.mxu0 0.0
      %1073 = vmatpush2.xpose.msra.mxu0 0.0
      %1074 = vmatprep.subr.mxu0 0.0
      %1075 = vmatpush2.xpose.msra.mxu0 0.0
      %1076 = vmatprep.subr.mxu0 0.0
      %1077 = vmatpush2.xpose.msra.mxu0 0.0
      %1078 = vmatprep.subr.mxu0 0.0
      %1079 = vmatpush2.xpose.msra.mxu0 0.0
      %1080 = vmatprep.subr.mxu0 0.0
      %1081 = vmatpush2.xpose.msra.mxu0 0.0
      %1082 = vmatprep.subr.mxu0 0.0
      %1083 = vmatpush2.xpose.msra.mxu0 0.0
      %1084 = vmatprep.subr.mxu0 0.0
      %1085 = vmatpush2.xpose.msra.mxu0 0.0
      %1086 = vmatprep.subr.mxu0 0.0
      %1087 = vmatpush2.xpose.msra.mxu0 0.0
      %1088 = vmatprep.subr.mxu0 0.0
      %1089 = vmatpush2.xpose.msra.mxu0 0.0
      %1090 = vmatprep.subr.mxu0 0.0
      %1091 = vmatpush2.xpose.msra.mxu0 0.0
      %1092 = vmatprep.subr.mxu0 0.0
      %1093 = vmatpush2.xpose.msra.mxu0 0.0
      %1094 = vmatprep.mubr.f32.mxu0 1.0
      %1095 = vmatmul.mubr.f32.gmra.mxu0 1.0
      %v1096 = vpop.f32.mrf.mxu0
      %v1097 = vadd.f32 0.0, %v1096
      %v1098 = vpop.f32.mrf.mxu0
      %1099 = vdwg.mxu0
      %v1100 = vmul.f32 %v1026, %v1026
      %v1101 = vmul.f32 %v1028, %v1028
      %1102 = vmatprep.subr.mxu0 0.0
      %1103 = vmatpush1.xpose.msra.mxu0 0.0
      %1104 = vmatprep.subr.mxu0 0.0
      %1105 = vmatpush1.xpose.msra.mxu0 0.0
      %1106 = vmatprep.subr.mxu0 0.0
      %1107 = vmatpush1.xpose.msra.mxu0 0.0
      %1108 = vmatprep.subr.mxu0 0.0
      %1109 = vmatpush1.xpose.msra.mxu0 0.0
      %1110 = vmatprep.subr.mxu0 0.0
      %1111 = vmatpush1.xpose.msra.mxu0 0.0
      %1112 = vmatprep.subr.mxu0 0.0
      %1113 = vmatpush1.xpose.msra.mxu0 0.0
      %1114 = vmatprep.subr.mxu0 0.0
      %1115 = vmatpush1.xpose.msra.mxu0 0.0
      %1116 = vmatprep.subr.mxu0 0.0
      %1117 = vmatpush1.xpose.msra.mxu0 0.0
      %1118 = vmatprep.subr.mxu0 0.0
      %1119 = vmatpush1.xpose.msra.mxu0 0.0
      %1120 = vmatprep.subr.mxu0 0.0
      %1121 = vmatpush1.xpose.msra.mxu0 0.0
      %1122 = vmatprep.subr.mxu0 0.0
      %1123 = vmatpush1.xpose.msra.mxu0 0.0
      %1124 = vmatprep.subr.mxu0 0.0
      %1125 = vmatpush1.xpose.msra.mxu0 0.0
      %1126 = vmatprep.subr.mxu0 0.0
      %1127 = vmatpush1.xpose.msra.mxu0 0.0
      %1128 = vmatprep.subr.mxu0 0.0
      %1129 = vmatpush1.xpose.msra.mxu0 0.0
      %1130 = vmatprep.subr.mxu0 0.0
      %1131 = vmatpush1.xpose.msra.mxu0 0.0
      %1132 = vmatprep.subr.mxu0 %v1101
      %1133 = vmatpush1.xpose.msra.mxu0 %v1100
      %1134 = vmatprep.subr.mxu0 0.0
      %1135 = vmatpush2.xpose.msra.mxu0 0.0
      %1136 = vmatprep.subr.mxu0 0.0
      %1137 = vmatpush2.xpose.msra.mxu0 0.0
      %1138 = vmatprep.subr.mxu0 0.0
      %1139 = vmatpush2.xpose.msra.mxu0 0.0
      %1140 = vmatprep.subr.mxu0 0.0
      %1141 = vmatpush2.xpose.msra.mxu0 0.0
      %1142 = vmatprep.subr.mxu0 0.0
      %1143 = vmatpush2.xpose.msra.mxu0 0.0
      %1144 = vmatprep.subr.mxu0 0.0
      %1145 = vmatpush2.xpose.msra.mxu0 0.0
      %1146 = vmatprep.subr.mxu0 0.0
      %1147 = vmatpush2.xpose.msra.mxu0 0.0
      %1148 = vmatprep.subr.mxu0 0.0
      %1149 = vmatpush2.xpose.msra.mxu0 0.0
      %1150 = vmatprep.subr.mxu0 0.0
      %1151 = vmatpush2.xpose.msra.mxu0 0.0
      %1152 = vmatprep.subr.mxu0 0.0
      %1153 = vmatpush2.xpose.msra.mxu0 0.0
      %1154 = vmatprep.subr.mxu0 0.0
      %1155 = vmatpush2.xpose.msra.mxu0 0.0
      %1156 = vmatprep.subr.mxu0 0.0
      %1157 = vmatpush2.xpose.msra.mxu0 0.0
      %1158 = vmatprep.subr.mxu0 0.0
      %1159 = vmatpush2.xpose.msra.mxu0 0.0
      %1160 = vmatprep.subr.mxu0 0.0
      %1161 = vmatpush2.xpose.msra.mxu0 0.0
      %1162 = vmatprep.subr.mxu0 0.0
      %1163 = vmatpush2.xpose.msra.mxu0 0.0
      %1164 = vmatprep.subr.mxu0 0.0
      %1165 = vmatpush2.xpose.msra.mxu0 0.0
      %1166 = vmatprep.mubr.f32.mxu0 1.0
      %1167 = vmatmul.mubr.f32.gmra.mxu0 1.0
      %v1168 = vpop.f32.mrf.mxu0
      %v1169 = vadd.f32 0.0, %v1168
      %v1170 = vpop.f32.mrf.mxu0
      %1171 = vdwg.mxu0
      %v1172 = vmul.f32 %v1097, 0.00390625
      %v1173 = vmul.f32 %v1169, 0.00390625
      %v1174 = vmul.f32 %v1172, %v1172
      %v1175 = vsub.f32 %v1173, %v1174
      %v1176 = vmax.f32 %v1175, 0.0
      %v1177 = vadd.f32 %v1176, 1e-05
      %v1178 = vrsqrt.pop %v1177
      %v1179 = vrcp.pop %v1177
      %v1180 = vmul.f32 %v1176, %v1179
      %v1181 = vadd.f32 %v1180, 1e-05
      %v1182 = vrsqrt.pop %v1181
      %v1183 = vmul.f32 %v1178, %v1182
      %v1184 = vsel %vm345, %v1026, 0.0
      %v1185 = vsel %vm345, %v1028, 0.0
      %v1186 = vadd.f32 %v1184, %v1185
      %1187 = vadd.xlane.f32.xlu0 %v1186
      %v1188 = vpop.xlane.xlu0 %1187
      %v1189 = vmul.f32 %v1188, 0.00390625
      %v1190 = vsub.f32 %v1026, %v1189
      %v1191 = vsub.f32 %v1028, %v1189
      %v1192 = vmax.f32 %v1190, 0.0
      %v1193 = vmax.f32 %v1191, 0.0
      %v1194 = vlaneseq
      %v1195 = vand.u32 %v1194, 127
      %v1196 = vadd.s32 %v1195, 128
      %vm1197 = vcmp.lt.s32.totalorder %v1195, 0
      %v1198 = vsub.s32 0, %v1195
      %v1199 = vsel %vm1197, %v1198, %v1195
      %v1200 = vshrl.u32 %v1199, 4
      %v1201 = vand.u32 %v1199, 15
      %v1202 = vsub.s32 0, %v1201
      %v1203 = vsel %vm1197, %v1202, %v1201
      %vm1204 = vcmp.lt.s32.totalorder %v1196, 0
      %v1205 = vsub.s32 0, %v1196
      %v1206 = vsel %vm1204, %v1205, %v1196
      %v1207 = vshrl.u32 %v1206, 4
      %v1208 = vand.u32 %v1206, 15
      %v1209 = vsub.s32 0, %v1208
      %v1210 = vsel %vm1204, %v1209, %v1208
      %vm1211 = vcmp.ne.s32.totalorder %v1203, 0
      %vm1212 = vcmp.ne.s32.totalorder %v1210, 0
      %vm1213 = vcmp.lt.s32.totalorder %v1203, 0
      %vm1214 = vcmp.lt.s32.totalorder %v1210, 0
      %vm1215 = vmand %vm1213, %vm1211
      %vm1216 = vmand %vm1214, %vm1212
      %v1217 = vadd.s32 %v1203, 16
      %v1218 = vadd.s32 %v1210, 16
      %v1219 = vsel %vm1215, %v1217, %v1203
      %v1220 = vsel %vm1216, %v1218, %v1210
      %v1221 = vadd.s32 %v1219, 4294967294
      %v1222 = vadd.s32 %v1220, 4294967294
      %vm1223 = vcmp.ge.s32.totalorder %v1221, 0
      %vm1224 = vcmp.ge.s32.totalorder %v1222, 0
      %vm1225 = vcmp.lt.s32.totalorder %v1221, 16
      %vm1226 = vcmp.lt.s32.totalorder %v1222, 16
      %vm1227 = vmand %vm1223, %vm1225
      %vm1228 = vmand %vm1224, %vm1226
      %v1229 = vsel %vm1227, 1, 0
      %v1230 = vsel %vm1228, 1, 0
      %vm1231 = vcmp.eq.s32.totalorder %v1229, 1
      %vm1232 = vcmp.eq.s32.totalorder %v1230, 1
      %1236 = vrot.lane.b32.xlu0 0.0, 34
      %v1237 = vpop.permute.xlu0 %1236
      %1238 = vrot.lane.b32.xlu0 %v1192, 34
      %v1239 = vpop.permute.xlu0 %1238
      %1240 = vrot.lane.b32.xlu0 %v1193, 34
      %v1241 = vpop.permute.xlu0 %1240
      %vm1242 = vcmask 277504
      %v1243 = vsel %vm1242, %v1237, %v1239
      %v1244 = vsel %vm1242, %v1239, %v1241
      %v1247 = vsel %vm1231, %v1243, 0.0
      %v1248 = vsel %vm1232, %v1244, 0.0
      %v1249 = vld [vmem:[%s7] sm:$0xf]
      %v1250 = vlaneseq
      %v1251 = vshrl.u32 %v1250, 7
      %v1252 = vsub.s32 0, %v1251
      %v1253 = vrot.slane %v1183, %v1252
      %v1254 = vmul.f32 %v1249, %v1253
      %s1255 = scalar_lea.vmem %s7, 4
      %v1256 = vld [vmem:[%s1255] sm:$0xf]
      %v1257 = vmul.f32 %v1256, %v1253
      %1258 = vrot.lane.b32.xlu0 0.0, 32
      %v1259 = vpop.permute.xlu0 %1258
      %1260 = vrot.lane.b32.xlu0 %v1192, 32
      %v1261 = vpop.permute.xlu0 %1260
      %1262 = vrot.lane.b32.xlu0 %v1193, 32
      %v1263 = vpop.permute.xlu0 %1262
      %vm1264 = vcmask 261120
      %v1265 = vsel %vm1264, %v1259, %v1261
      %v1266 = vsel %vm1264, %v1261, %v1263
      %v1268 = vsel %vm338, %v1257, 0
      %v1270 = vsel %vm345, %v1265, 0
      %v1272 = vsel %vm345, %v1266, 0
      %1274 = vmatprep.subr.mxu0 0.0
      %1275 = vmatpush1.msra.mxu0 0.0
      %1276 = vmatprep.subr.mxu0 0.0
      %1277 = vmatpush1.msra.mxu0 0.0
      %1278 = vmatprep.subr.mxu0 0.0
      %1279 = vmatpush1.msra.mxu0 0.0
      %1280 = vmatprep.subr.mxu0 0.0
      %1281 = vmatpush1.msra.mxu0 0.0
      %1282 = vmatprep.subr.mxu0 0.0
      %1283 = vmatpush1.msra.mxu0 0.0
      %1284 = vmatprep.subr.mxu0 0.0
      %1285 = vmatpush1.msra.mxu0 0.0
      %1286 = vmatprep.subr.mxu0 0.0
      %1287 = vmatpush1.msra.mxu0 0.0
      %1288 = vmatprep.subr.mxu0 0.0
      %1289 = vmatpush1.msra.mxu0 0.0
      %1290 = vmatprep.subr.mxu0 0.0
      %1291 = vmatpush1.msra.mxu0 0.0
      %1292 = vmatprep.subr.mxu0 0.0
      %1293 = vmatpush1.msra.mxu0 0.0
      %1294 = vmatprep.subr.mxu0 0.0
      %1295 = vmatpush1.msra.mxu0 0.0
      %1296 = vmatprep.subr.mxu0 0.0
      %1297 = vmatpush1.msra.mxu0 0.0
      %1298 = vmatprep.subr.mxu0 0.0
      %1299 = vmatpush1.msra.mxu0 0.0
      %1300 = vmatprep.subr.mxu0 0.0
      %1301 = vmatpush1.msra.mxu0 0.0
      %1302 = vmatprep.subr.mxu0 0.0
      %1303 = vmatpush1.msra.mxu0 0.0
      %1304 = vmatprep.subr.mxu0 %v1272
      %1305 = vmatpush1.msra.mxu0 %v1270
      %1306 = vmatprep.subr.mxu0 0.0
      %1307 = vmatpush2.msra.mxu0 0.0
      %1308 = vmatprep.subr.mxu0 0.0
      %1309 = vmatpush2.msra.mxu0 0.0
      %1310 = vmatprep.subr.mxu0 0.0
      %1311 = vmatpush2.msra.mxu0 0.0
      %1312 = vmatprep.subr.mxu0 0.0
      %1313 = vmatpush2.msra.mxu0 0.0
      %1314 = vmatprep.subr.mxu0 0.0
      %1315 = vmatpush2.msra.mxu0 0.0
      %1316 = vmatprep.subr.mxu0 0.0
      %1317 = vmatpush2.msra.mxu0 0.0
      %1318 = vmatprep.subr.mxu0 0.0
      %1319 = vmatpush2.msra.mxu0 0.0
      %1320 = vmatprep.subr.mxu0 0.0
      %1321 = vmatpush2.msra.mxu0 0.0
      %1322 = vmatprep.subr.mxu0 0.0
      %1323 = vmatpush2.msra.mxu0 0.0
      %1324 = vmatprep.subr.mxu0 0.0
      %1325 = vmatpush2.msra.mxu0 0.0
      %1326 = vmatprep.subr.mxu0 0.0
      %1327 = vmatpush2.msra.mxu0 0.0
      %1328 = vmatprep.subr.mxu0 0.0
      %1329 = vmatpush2.msra.mxu0 0.0
      %1330 = vmatprep.subr.mxu0 0.0
      %1331 = vmatpush2.msra.mxu0 0.0
      %1332 = vmatprep.subr.mxu0 0.0
      %1333 = vmatpush2.msra.mxu0 0.0
      %1334 = vmatprep.subr.mxu0 0.0
      %1335 = vmatpush2.msra.mxu0 0.0
      %1336 = vmatprep.subr.mxu0 0.0
      %1337 = vmatpush2.msra.mxu0 0.0
      %1338 = vmatprep.mubr.f32.mxu0 0.0
      %1339 = vmatmul.mubr.f32.gmra.mxu0 %v1268
      %v1340 = vpop.f32.mrf.mxu0
      %v1341 = vadd.f32 0.0, %v1340
      %v1342 = vpop.f32.mrf.mxu0
      %v1343 = vadd.f32 0.0, %v1342
      %1344 = vdwg.mxu0
      %v1346 = vsel %vm338, %v1254, 0
      %v1349 = vsel %vm345, %v1247, 0
      %v1352 = vsel %vm345, %v1248, 0
      %1354 = vmatprep.subr.mxu0 0.0
      %1355 = vmatpush1.msra.mxu0 0.0
      %1356 = vmatprep.subr.mxu0 0.0
      %1357 = vmatpush1.msra.mxu0 0.0
      %1358 = vmatprep.subr.mxu0 0.0
      %1359 = vmatpush1.msra.mxu0 0.0
      %1360 = vmatprep.subr.mxu0 0.0
      %1361 = vmatpush1.msra.mxu0 0.0
      %1362 = vmatprep.subr.mxu0 0.0
      %1363 = vmatpush1.msra.mxu0 0.0
      %1364 = vmatprep.subr.mxu0 0.0
      %1365 = vmatpush1.msra.mxu0 0.0
      %1366 = vmatprep.subr.mxu0 0.0
      %1367 = vmatpush1.msra.mxu0 0.0
      %1368 = vmatprep.subr.mxu0 0.0
      %1369 = vmatpush1.msra.mxu0 0.0
      %1370 = vmatprep.subr.mxu0 0.0
      %1371 = vmatpush1.msra.mxu0 0.0
      %1372 = vmatprep.subr.mxu0 0.0
      %1373 = vmatpush1.msra.mxu0 0.0
      %1374 = vmatprep.subr.mxu0 0.0
      %1375 = vmatpush1.msra.mxu0 0.0
      %1376 = vmatprep.subr.mxu0 0.0
      %1377 = vmatpush1.msra.mxu0 0.0
      %1378 = vmatprep.subr.mxu0 0.0
      %1379 = vmatpush1.msra.mxu0 0.0
      %1380 = vmatprep.subr.mxu0 0.0
      %1381 = vmatpush1.msra.mxu0 0.0
      %1382 = vmatprep.subr.mxu0 0.0
      %1383 = vmatpush1.msra.mxu0 0.0
      %1384 = vmatprep.subr.mxu0 %v1352
      %1385 = vmatpush1.msra.mxu0 %v1349
      %1386 = vmatprep.subr.mxu0 0.0
      %1387 = vmatpush2.msra.mxu0 0.0
      %1388 = vmatprep.subr.mxu0 0.0
      %1389 = vmatpush2.msra.mxu0 0.0
      %1390 = vmatprep.subr.mxu0 0.0
      %1391 = vmatpush2.msra.mxu0 0.0
      %1392 = vmatprep.subr.mxu0 0.0
      %1393 = vmatpush2.msra.mxu0 0.0
      %1394 = vmatprep.subr.mxu0 0.0
      %1395 = vmatpush2.msra.mxu0 0.0
      %1396 = vmatprep.subr.mxu0 0.0
      %1397 = vmatpush2.msra.mxu0 0.0
      %1398 = vmatprep.subr.mxu0 0.0
      %1399 = vmatpush2.msra.mxu0 0.0
      %1400 = vmatprep.subr.mxu0 0.0
      %1401 = vmatpush2.msra.mxu0 0.0
      %1402 = vmatprep.subr.mxu0 0.0
      %1403 = vmatpush2.msra.mxu0 0.0
      %1404 = vmatprep.subr.mxu0 0.0
      %1405 = vmatpush2.msra.mxu0 0.0
      %1406 = vmatprep.subr.mxu0 0.0
      %1407 = vmatpush2.msra.mxu0 0.0
      %1408 = vmatprep.subr.mxu0 0.0
      %1409 = vmatpush2.msra.mxu0 0.0
      %1410 = vmatprep.subr.mxu0 0.0
      %1411 = vmatpush2.msra.mxu0 0.0
      %1412 = vmatprep.subr.mxu0 0.0
      %1413 = vmatpush2.msra.mxu0 0.0
      %1414 = vmatprep.subr.mxu0 0.0
      %1415 = vmatpush2.msra.mxu0 0.0
      %1416 = vmatprep.subr.mxu0 0.0
      %1417 = vmatpush2.msra.mxu0 0.0
      %1418 = vmatprep.mubr.f32.mxu0 0.0
      %1419 = vmatmul.mubr.f32.gmra.mxu0 %v1346
      %v1420 = vpop.f32.mrf.mxu0
      %v1421 = vadd.f32 %v1341, %v1420
      %v1422 = vpop.f32.mrf.mxu0
      %v1423 = vadd.f32 %v1343, %v1422
      %1424 = vdwg.mxu0
      %v1425 = vadd.s32 %v1219, 2
      %v1426 = vadd.s32 %v1220, 2
      %vm1427 = vcmp.ge.s32.totalorder %v1425, 0
      %vm1428 = vcmp.ge.s32.totalorder %v1426, 0
      %vm1429 = vcmp.lt.s32.totalorder %v1425, 16
      %vm1430 = vcmp.lt.s32.totalorder %v1426, 16
      %vm1431 = vmand %vm1427, %vm1429
      %vm1432 = vmand %vm1428, %vm1430
      %v1433 = vsel %vm1431, 1, 0
      %v1434 = vsel %vm1432, 1, 0
      %vm1435 = vcmp.eq.s32.totalorder %v1433, 1
      %vm1436 = vcmp.eq.s32.totalorder %v1434, 1
      %1437 = vrot.lane.b32.xlu0 0.0, 30
      %v1438 = vpop.permute.xlu0 %1437
      %1439 = vrot.lane.b32.xlu0 %v1192, 30
      %v1440 = vpop.permute.xlu0 %1439
      %1441 = vrot.lane.b32.xlu0 %v1193, 30
      %v1442 = vpop.permute.xlu0 %1441
      %vm1443 = vcmask 244736
      %v1444 = vsel %vm1443, %v1438, %v1440
      %v1445 = vsel %vm1443, %v1440, %v1442
      %v1448 = vsel %vm1435, %v1444, 0.0
      %v1449 = vsel %vm1436, %v1445, 0.0
      %s1450 = scalar_lea.vmem %s7, 8
      %v1451 = vld [vmem:[%s1450] sm:$0xf]
      %v1452 = vmul.f32 %v1451, %v1253
      %v1454 = vsel %vm338, %v1452, 0
      %v1457 = vsel %vm345, %v1448, 0
      %v1460 = vsel %vm345, %v1449, 0
      %1462 = vmatprep.subr.mxu0 0.0
      %1463 = vmatpush1.msra.mxu0 0.0
      %1464 = vmatprep.subr.mxu0 0.0
      %1465 = vmatpush1.msra.mxu0 0.0
      %1466 = vmatprep.subr.mxu0 0.0
      %1467 = vmatpush1.msra.mxu0 0.0
      %1468 = vmatprep.subr.mxu0 0.0
      %1469 = vmatpush1.msra.mxu0 0.0
      %1470 = vmatprep.subr.mxu0 0.0
      %1471 = vmatpush1.msra.mxu0 0.0
      %1472 = vmatprep.subr.mxu0 0.0
      %1473 = vmatpush1.msra.mxu0 0.0
      %1474 = vmatprep.subr.mxu0 0.0
      %1475 = vmatpush1.msra.mxu0 0.0
      %1476 = vmatprep.subr.mxu0 0.0
      %1477 = vmatpush1.msra.mxu0 0.0
      %1478 = vmatprep.subr.mxu0 0.0
      %1479 = vmatpush1.msra.mxu0 0.0
      %1480 = vmatprep.subr.mxu0 0.0
      %1481 = vmatpush1.msra.mxu0 0.0
      %1482 = vmatprep.subr.mxu0 0.0
      %1483 = vmatpush1.msra.mxu0 0.0
      %1484 = vmatprep.subr.mxu0 0.0
      %1485 = vmatpush1.msra.mxu0 0.0
      %1486 = vmatprep.subr.mxu0 0.0
      %1487 = vmatpush1.msra.mxu0 0.0
      %1488 = vmatprep.subr.mxu0 0.0
      %1489 = vmatpush1.msra.mxu0 0.0
      %1490 = vmatprep.subr.mxu0 0.0
      %1491 = vmatpush1.msra.mxu0 0.0
      %1492 = vmatprep.subr.mxu0 %v1460
      %1493 = vmatpush1.msra.mxu0 %v1457
      %1494 = vmatprep.subr.mxu0 0.0
      %1495 = vmatpush2.msra.mxu0 0.0
      %1496 = vmatprep.subr.mxu0 0.0
      %1497 = vmatpush2.msra.mxu0 0.0
      %1498 = vmatprep.subr.mxu0 0.0
      %1499 = vmatpush2.msra.mxu0 0.0
      %1500 = vmatprep.subr.mxu0 0.0
      %1501 = vmatpush2.msra.mxu0 0.0
      %1502 = vmatprep.subr.mxu0 0.0
      %1503 = vmatpush2.msra.mxu0 0.0
      %1504 = vmatprep.subr.mxu0 0.0
      %1505 = vmatpush2.msra.mxu0 0.0
      %1506 = vmatprep.subr.mxu0 0.0
      %1507 = vmatpush2.msra.mxu0 0.0
      %1508 = vmatprep.subr.mxu0 0.0
      %1509 = vmatpush2.msra.mxu0 0.0
      %1510 = vmatprep.subr.mxu0 0.0
      %1511 = vmatpush2.msra.mxu0 0.0
      %1512 = vmatprep.subr.mxu0 0.0
      %1513 = vmatpush2.msra.mxu0 0.0
      %1514 = vmatprep.subr.mxu0 0.0
      %1515 = vmatpush2.msra.mxu0 0.0
      %1516 = vmatprep.subr.mxu0 0.0
      %1517 = vmatpush2.msra.mxu0 0.0
      %1518 = vmatprep.subr.mxu0 0.0
      %1519 = vmatpush2.msra.mxu0 0.0
      %1520 = vmatprep.subr.mxu0 0.0
      %1521 = vmatpush2.msra.mxu0 0.0
      %1522 = vmatprep.subr.mxu0 0.0
      %1523 = vmatpush2.msra.mxu0 0.0
      %1524 = vmatprep.subr.mxu0 0.0
      %1525 = vmatpush2.msra.mxu0 0.0
      %1526 = vmatprep.mubr.f32.mxu0 0.0
      %1527 = vmatmul.mubr.f32.gmra.mxu0 %v1454
      %v1528 = vpop.f32.mrf.mxu0
      %v1529 = vadd.f32 0.0, %v1528
      %v1530 = vpop.f32.mrf.mxu0
      %v1531 = vadd.f32 0.0, %v1530
      %1532 = vdwg.mxu0
      %v1533 = vadd.f32 %v1421, %v1529
      %v1534 = vadd.f32 %v1423, %v1531
      %1535 = vrot.lane.b32.xlu0 0.0, 2
      %v1536 = vpop.permute.xlu0 %1535
      %1537 = vrot.lane.b32.xlu0 %v1192, 2
      %v1538 = vpop.permute.xlu0 %1537
      %1539 = vrot.lane.b32.xlu0 %v1193, 2
      %v1540 = vpop.permute.xlu0 %1539
      %vm1541 = vcmask 15360
      %v1542 = vsel %vm1541, %v1536, %v1538
      %v1543 = vsel %vm1541, %v1538, %v1540
      %v1546 = vsel %vm1231, %v1542, 0.0
      %v1547 = vsel %vm1232, %v1543, 0.0
      %s1548 = scalar_lea.vmem %s7, 12
      %v1549 = vld [vmem:[%s1548] sm:$0xf]
      %v1550 = vmul.f32 %v1549, %v1253
      %v1552 = vsel %vm338, %v1550, 0
      %v1555 = vsel %vm345, %v1546, 0
      %v1558 = vsel %vm345, %v1547, 0
      %1560 = vmatprep.subr.mxu0 0.0
      %1561 = vmatpush1.msra.mxu0 0.0
      %1562 = vmatprep.subr.mxu0 0.0
      %1563 = vmatpush1.msra.mxu0 0.0
      %1564 = vmatprep.subr.mxu0 0.0
      %1565 = vmatpush1.msra.mxu0 0.0
      %1566 = vmatprep.subr.mxu0 0.0
      %1567 = vmatpush1.msra.mxu0 0.0
      %1568 = vmatprep.subr.mxu0 0.0
      %1569 = vmatpush1.msra.mxu0 0.0
      %1570 = vmatprep.subr.mxu0 0.0
      %1571 = vmatpush1.msra.mxu0 0.0
      %1572 = vmatprep.subr.mxu0 0.0
      %1573 = vmatpush1.msra.mxu0 0.0
      %1574 = vmatprep.subr.mxu0 0.0
      %1575 = vmatpush1.msra.mxu0 0.0
      %1576 = vmatprep.subr.mxu0 0.0
      %1577 = vmatpush1.msra.mxu0 0.0
      %1578 = vmatprep.subr.mxu0 0.0
      %1579 = vmatpush1.msra.mxu0 0.0
      %1580 = vmatprep.subr.mxu0 0.0
      %1581 = vmatpush1.msra.mxu0 0.0
      %1582 = vmatprep.subr.mxu0 0.0
      %1583 = vmatpush1.msra.mxu0 0.0
      %1584 = vmatprep.subr.mxu0 0.0
      %1585 = vmatpush1.msra.mxu0 0.0
      %1586 = vmatprep.subr.mxu0 0.0
      %1587 = vmatpush1.msra.mxu0 0.0
      %1588 = vmatprep.subr.mxu0 0.0
      %1589 = vmatpush1.msra.mxu0 0.0
      %1590 = vmatprep.subr.mxu0 %v1558
      %1591 = vmatpush1.msra.mxu0 %v1555
      %1592 = vmatprep.subr.mxu0 0.0
      %1593 = vmatpush2.msra.mxu0 0.0
      %1594 = vmatprep.subr.mxu0 0.0
      %1595 = vmatpush2.msra.mxu0 0.0
      %1596 = vmatprep.subr.mxu0 0.0
      %1597 = vmatpush2.msra.mxu0 0.0
      %1598 = vmatprep.subr.mxu0 0.0
      %1599 = vmatpush2.msra.mxu0 0.0
      %1600 = vmatprep.subr.mxu0 0.0
      %1601 = vmatpush2.msra.mxu0 0.0
      %1602 = vmatprep.subr.mxu0 0.0
      %1603 = vmatpush2.msra.mxu0 0.0
      %1604 = vmatprep.subr.mxu0 0.0
      %1605 = vmatpush2.msra.mxu0 0.0
      %1606 = vmatprep.subr.mxu0 0.0
      %1607 = vmatpush2.msra.mxu0 0.0
      %1608 = vmatprep.subr.mxu0 0.0
      %1609 = vmatpush2.msra.mxu0 0.0
      %1610 = vmatprep.subr.mxu0 0.0
      %1611 = vmatpush2.msra.mxu0 0.0
      %1612 = vmatprep.subr.mxu0 0.0
      %1613 = vmatpush2.msra.mxu0 0.0
      %1614 = vmatprep.subr.mxu0 0.0
      %1615 = vmatpush2.msra.mxu0 0.0
      %1616 = vmatprep.subr.mxu0 0.0
      %1617 = vmatpush2.msra.mxu0 0.0
      %1618 = vmatprep.subr.mxu0 0.0
      %1619 = vmatpush2.msra.mxu0 0.0
      %1620 = vmatprep.subr.mxu0 0.0
      %1621 = vmatpush2.msra.mxu0 0.0
      %1622 = vmatprep.subr.mxu0 0.0
      %1623 = vmatpush2.msra.mxu0 0.0
      %1624 = vmatprep.mubr.f32.mxu0 0.0
      %1625 = vmatmul.mubr.f32.gmra.mxu0 %v1552
      %v1626 = vpop.f32.mrf.mxu0
      %v1627 = vadd.f32 0.0, %v1626
      %v1628 = vpop.f32.mrf.mxu0
      %v1629 = vadd.f32 0.0, %v1628
      %1630 = vdwg.mxu0
      %v1631 = vadd.f32 %v1533, %v1627
      %v1632 = vadd.f32 %v1534, %v1629
      %s1633 = scalar_lea.vmem %s7, 16
      %v1634 = vld [vmem:[%s1633] sm:$0xf]
      %v1635 = vmul.f32 %v1634, %v1253
      %v1637 = vsel %vm338, %v1635, 0
      %v1639 = vsel %vm345, %v1192, 0
      %v1641 = vsel %vm345, %v1193, 0
      %1643 = vmatprep.subr.mxu0 0.0
      %1644 = vmatpush1.msra.mxu0 0.0
      %1645 = vmatprep.subr.mxu0 0.0
      %1646 = vmatpush1.msra.mxu0 0.0
      %1647 = vmatprep.subr.mxu0 0.0
      %1648 = vmatpush1.msra.mxu0 0.0
      %1649 = vmatprep.subr.mxu0 0.0
      %1650 = vmatpush1.msra.mxu0 0.0
      %1651 = vmatprep.subr.mxu0 0.0
      %1652 = vmatpush1.msra.mxu0 0.0
      %1653 = vmatprep.subr.mxu0 0.0
      %1654 = vmatpush1.msra.mxu0 0.0
      %1655 = vmatprep.subr.mxu0 0.0
      %1656 = vmatpush1.msra.mxu0 0.0
      %1657 = vmatprep.subr.mxu0 0.0
      %1658 = vmatpush1.msra.mxu0 0.0
      %1659 = vmatprep.subr.mxu0 0.0
      %1660 = vmatpush1.msra.mxu0 0.0
      %1661 = vmatprep.subr.mxu0 0.0
      %1662 = vmatpush1.msra.mxu0 0.0
      %1663 = vmatprep.subr.mxu0 0.0
      %1664 = vmatpush1.msra.mxu0 0.0
      %1665 = vmatprep.subr.mxu0 0.0
      %1666 = vmatpush1.msra.mxu0 0.0
      %1667 = vmatprep.subr.mxu0 0.0
      %1668 = vmatpush1.msra.mxu0 0.0
      %1669 = vmatprep.subr.mxu0 0.0
      %1670 = vmatpush1.msra.mxu0 0.0
      %1671 = vmatprep.subr.mxu0 0.0
      %1672 = vmatpush1.msra.mxu0 0.0
      %1673 = vmatprep.subr.mxu0 %v1641
      %1674 = vmatpush1.msra.mxu0 %v1639
      %1675 = vmatprep.subr.mxu0 0.0
      %1676 = vmatpush2.msra.mxu0 0.0
      %1677 = vmatprep.subr.mxu0 0.0
      %1678 = vmatpush2.msra.mxu0 0.0
      %1679 = vmatprep.subr.mxu0 0.0
      %1680 = vmatpush2.msra.mxu0 0.0
      %1681 = vmatprep.subr.mxu0 0.0
      %1682 = vmatpush2.msra.mxu0 0.0
      %1683 = vmatprep.subr.mxu0 0.0
      %1684 = vmatpush2.msra.mxu0 0.0
      %1685 = vmatprep.subr.mxu0 0.0
      %1686 = vmatpush2.msra.mxu0 0.0
      %1687 = vmatprep.subr.mxu0 0.0
      %1688 = vmatpush2.msra.mxu0 0.0
      %1689 = vmatprep.subr.mxu0 0.0
      %1690 = vmatpush2.msra.mxu0 0.0
      %1691 = vmatprep.subr.mxu0 0.0
      %1692 = vmatpush2.msra.mxu0 0.0
      %1693 = vmatprep.subr.mxu0 0.0
      %1694 = vmatpush2.msra.mxu0 0.0
      %1695 = vmatprep.subr.mxu0 0.0
      %1696 = vmatpush2.msra.mxu0 0.0
      %1697 = vmatprep.subr.mxu0 0.0
      %1698 = vmatpush2.msra.mxu0 0.0
      %1699 = vmatprep.subr.mxu0 0.0
      %1700 = vmatpush2.msra.mxu0 0.0
      %1701 = vmatprep.subr.mxu0 0.0
      %1702 = vmatpush2.msra.mxu0 0.0
      %1703 = vmatprep.subr.mxu0 0.0
      %1704 = vmatpush2.msra.mxu0 0.0
      %1705 = vmatprep.subr.mxu0 0.0
      %1706 = vmatpush2.msra.mxu0 0.0
      %1707 = vmatprep.mubr.f32.mxu0 0.0
      %1708 = vmatmul.mubr.f32.gmra.mxu0 %v1637
      %v1709 = vpop.f32.mrf.mxu0
      %v1710 = vadd.f32 0.0, %v1709
      %v1711 = vpop.f32.mrf.mxu0
      %v1712 = vadd.f32 0.0, %v1711
      %1713 = vdwg.mxu0
      %v1714 = vadd.f32 %v1631, %v1710
      %v1715 = vadd.f32 %v1632, %v1712
      %1716 = vrot.lane.b32.xlu0 %v1192, 126
      %v1717 = vpop.permute.xlu0 %1716
      %1718 = vrot.lane.b32.xlu0 %v1193, 126
      %v1719 = vpop.permute.xlu0 %1718
      %1720 = vrot.lane.b32.xlu0 0.0, 126
      %v1721 = vpop.permute.xlu0 %1720
      %vm1722 = vcmask 1031168
      %v1723 = vsel %vm1722, %v1717, %v1719
      %v1724 = vsel %vm1722, %v1719, %v1721
      %v1727 = vsel %vm1435, %v1723, 0.0
      %v1728 = vsel %vm1436, %v1724, 0.0
      %s1729 = scalar_lea.vmem %s7, 20
      %v1730 = vld [vmem:[%s1729] sm:$0xf]
      %v1731 = vmul.f32 %v1730, %v1253
      %v1733 = vsel %vm338, %v1731, 0
      %v1736 = vsel %vm345, %v1727, 0
      %v1739 = vsel %vm345, %v1728, 0
      %1741 = vmatprep.subr.mxu0 0.0
      %1742 = vmatpush1.msra.mxu0 0.0
      %1743 = vmatprep.subr.mxu0 0.0
      %1744 = vmatpush1.msra.mxu0 0.0
      %1745 = vmatprep.subr.mxu0 0.0
      %1746 = vmatpush1.msra.mxu0 0.0
      %1747 = vmatprep.subr.mxu0 0.0
      %1748 = vmatpush1.msra.mxu0 0.0
      %1749 = vmatprep.subr.mxu0 0.0
      %1750 = vmatpush1.msra.mxu0 0.0
      %1751 = vmatprep.subr.mxu0 0.0
      %1752 = vmatpush1.msra.mxu0 0.0
      %1753 = vmatprep.subr.mxu0 0.0
      %1754 = vmatpush1.msra.mxu0 0.0
      %1755 = vmatprep.subr.mxu0 0.0
      %1756 = vmatpush1.msra.mxu0 0.0
      %1757 = vmatprep.subr.mxu0 0.0
      %1758 = vmatpush1.msra.mxu0 0.0
      %1759 = vmatprep.subr.mxu0 0.0
      %1760 = vmatpush1.msra.mxu0 0.0
      %1761 = vmatprep.subr.mxu0 0.0
      %1762 = vmatpush1.msra.mxu0 0.0
      %1763 = vmatprep.subr.mxu0 0.0
      %1764 = vmatpush1.msra.mxu0 0.0
      %1765 = vmatprep.subr.mxu0 0.0
      %1766 = vmatpush1.msra.mxu0 0.0
      %1767 = vmatprep.subr.mxu0 0.0
      %1768 = vmatpush1.msra.mxu0 0.0
      %1769 = vmatprep.subr.mxu0 0.0
      %1770 = vmatpush1.msra.mxu0 0.0
      %1771 = vmatprep.subr.mxu0 %v1739
      %1772 = vmatpush1.msra.mxu0 %v1736
      %1773 = vmatprep.subr.mxu0 0.0
      %1774 = vmatpush2.msra.mxu0 0.0
      %1775 = vmatprep.subr.mxu0 0.0
      %1776 = vmatpush2.msra.mxu0 0.0
      %1777 = vmatprep.subr.mxu0 0.0
      %1778 = vmatpush2.msra.mxu0 0.0
      %1779 = vmatprep.subr.mxu0 0.0
      %1780 = vmatpush2.msra.mxu0 0.0
      %1781 = vmatprep.subr.mxu0 0.0
      %1782 = vmatpush2.msra.mxu0 0.0
      %1783 = vmatprep.subr.mxu0 0.0
      %1784 = vmatpush2.msra.mxu0 0.0
      %1785 = vmatprep.subr.mxu0 0.0
      %1786 = vmatpush2.msra.mxu0 0.0
      %1787 = vmatprep.subr.mxu0 0.0
      %1788 = vmatpush2.msra.mxu0 0.0
      %1789 = vmatprep.subr.mxu0 0.0
      %1790 = vmatpush2.msra.mxu0 0.0
      %1791 = vmatprep.subr.mxu0 0.0
      %1792 = vmatpush2.msra.mxu0 0.0
      %1793 = vmatprep.subr.mxu0 0.0
      %1794 = vmatpush2.msra.mxu0 0.0
      %1795 = vmatprep.subr.mxu0 0.0
      %1796 = vmatpush2.msra.mxu0 0.0
      %1797 = vmatprep.subr.mxu0 0.0
      %1798 = vmatpush2.msra.mxu0 0.0
      %1799 = vmatprep.subr.mxu0 0.0
      %1800 = vmatpush2.msra.mxu0 0.0
      %1801 = vmatprep.subr.mxu0 0.0
      %1802 = vmatpush2.msra.mxu0 0.0
      %1803 = vmatprep.subr.mxu0 0.0
      %1804 = vmatpush2.msra.mxu0 0.0
      %1805 = vmatprep.mubr.f32.mxu0 0.0
      %1806 = vmatmul.mubr.f32.gmra.mxu0 %v1733
      %v1807 = vpop.f32.mrf.mxu0
      %v1808 = vadd.f32 0.0, %v1807
      %v1809 = vpop.f32.mrf.mxu0
      %v1810 = vadd.f32 0.0, %v1809
      %1811 = vdwg.mxu0
      %v1812 = vadd.f32 %v1714, %v1808
      %v1813 = vadd.f32 %v1715, %v1810
      %1814 = vrot.lane.b32.xlu0 %v1192, 98
      %v1815 = vpop.permute.xlu0 %1814
      %1816 = vrot.lane.b32.xlu0 %v1193, 98
      %v1817 = vpop.permute.xlu0 %1816
      %1818 = vrot.lane.b32.xlu0 0.0, 98
      %v1819 = vpop.permute.xlu0 %1818
      %vm1820 = vcmask 801792
      %v1821 = vsel %vm1820, %v1815, %v1817
      %v1822 = vsel %vm1820, %v1817, %v1819
      %v1825 = vsel %vm1231, %v1821, 0.0
      %v1826 = vsel %vm1232, %v1822, 0.0
      %s1827 = scalar_lea.vmem %s7, 24
      %v1828 = vld [vmem:[%s1827] sm:$0xf]
      %v1829 = vmul.f32 %v1828, %v1253
      %v1831 = vsel %vm338, %v1829, 0
      %v1834 = vsel %vm345, %v1825, 0
      %v1837 = vsel %vm345, %v1826, 0
      %1839 = vmatprep.subr.mxu0 0.0
      %1840 = vmatpush1.msra.mxu0 0.0
      %1841 = vmatprep.subr.mxu0 0.0
      %1842 = vmatpush1.msra.mxu0 0.0
      %1843 = vmatprep.subr.mxu0 0.0
      %1844 = vmatpush1.msra.mxu0 0.0
      %1845 = vmatprep.subr.mxu0 0.0
      %1846 = vmatpush1.msra.mxu0 0.0
      %1847 = vmatprep.subr.mxu0 0.0
      %1848 = vmatpush1.msra.mxu0 0.0
      %1849 = vmatprep.subr.mxu0 0.0
      %1850 = vmatpush1.msra.mxu0 0.0
      %1851 = vmatprep.subr.mxu0 0.0
      %1852 = vmatpush1.msra.mxu0 0.0
      %1853 = vmatprep.subr.mxu0 0.0
      %1854 = vmatpush1.msra.mxu0 0.0
      %1855 = vmatprep.subr.mxu0 0.0
      %1856 = vmatpush1.msra.mxu0 0.0
      %1857 = vmatprep.subr.mxu0 0.0
      %1858 = vmatpush1.msra.mxu0 0.0
      %1859 = vmatprep.subr.mxu0 0.0
      %1860 = vmatpush1.msra.mxu0 0.0
      %1861 = vmatprep.subr.mxu0 0.0
      %1862 = vmatpush1.msra.mxu0 0.0
      %1863 = vmatprep.subr.mxu0 0.0
      %1864 = vmatpush1.msra.mxu0 0.0
      %1865 = vmatprep.subr.mxu0 0.0
      %1866 = vmatpush1.msra.mxu0 0.0
      %1867 = vmatprep.subr.mxu0 0.0
      %1868 = vmatpush1.msra.mxu0 0.0
      %1869 = vmatprep.subr.mxu0 %v1837
      %1870 = vmatpush1.msra.mxu0 %v1834
      %1871 = vmatprep.subr.mxu0 0.0
      %1872 = vmatpush2.msra.mxu0 0.0
      %1873 = vmatprep.subr.mxu0 0.0
      %1874 = vmatpush2.msra.mxu0 0.0
      %1875 = vmatprep.subr.mxu0 0.0
      %1876 = vmatpush2.msra.mxu0 0.0
      %1877 = vmatprep.subr.mxu0 0.0
      %1878 = vmatpush2.msra.mxu0 0.0
      %1879 = vmatprep.subr.mxu0 0.0
      %1880 = vmatpush2.msra.mxu0 0.0
      %1881 = vmatprep.subr.mxu0 0.0
      %1882 = vmatpush2.msra.mxu0 0.0
      %1883 = vmatprep.subr.mxu0 0.0
      %1884 = vmatpush2.msra.mxu0 0.0
      %1885 = vmatprep.subr.mxu0 0.0
      %1886 = vmatpush2.msra.mxu0 0.0
      %1887 = vmatprep.subr.mxu0 0.0
      %1888 = vmatpush2.msra.mxu0 0.0
      %1889 = vmatprep.subr.mxu0 0.0
      %1890 = vmatpush2.msra.mxu0 0.0
      %1891 = vmatprep.subr.mxu0 0.0
      %1892 = vmatpush2.msra.mxu0 0.0
      %1893 = vmatprep.subr.mxu0 0.0
      %1894 = vmatpush2.msra.mxu0 0.0
      %1895 = vmatprep.subr.mxu0 0.0
      %1896 = vmatpush2.msra.mxu0 0.0
      %1897 = vmatprep.subr.mxu0 0.0
      %1898 = vmatpush2.msra.mxu0 0.0
      %1899 = vmatprep.subr.mxu0 0.0
      %1900 = vmatpush2.msra.mxu0 0.0
      %1901 = vmatprep.subr.mxu0 0.0
      %1902 = vmatpush2.msra.mxu0 0.0
      %1903 = vmatprep.mubr.f32.mxu0 0.0
      %1904 = vmatmul.mubr.f32.gmra.mxu0 %v1831
      %v1905 = vpop.f32.mrf.mxu0
      %v1906 = vadd.f32 0.0, %v1905
      %v1907 = vpop.f32.mrf.mxu0
      %v1908 = vadd.f32 0.0, %v1907
      %1909 = vdwg.mxu0
      %v1910 = vadd.f32 %v1812, %v1906
      %v1911 = vadd.f32 %v1813, %v1908
      %s1912 = scalar_lea.vmem %s7, 28
      %v1913 = vld [vmem:[%s1912] sm:$0xf]
      %v1914 = vmul.f32 %v1913, %v1253
      %1915 = vrot.lane.b32.xlu0 %v1192, 96
      %v1916 = vpop.permute.xlu0 %1915
      %1917 = vrot.lane.b32.xlu0 %v1193, 96
      %v1918 = vpop.permute.xlu0 %1917
      %1919 = vrot.lane.b32.xlu0 0.0, 96
      %v1920 = vpop.permute.xlu0 %1919
      %vm1921 = vcmask 785408
      %v1922 = vsel %vm1921, %v1916, %v1918
      %v1923 = vsel %vm1921, %v1918, %v1920
      %v1925 = vsel %vm338, %v1914, 0
      %v1927 = vsel %vm345, %v1922, 0
      %v1929 = vsel %vm345, %v1923, 0
      %1931 = vmatprep.subr.mxu0 0.0
      %1932 = vmatpush1.msra.mxu0 0.0
      %1933 = vmatprep.subr.mxu0 0.0
      %1934 = vmatpush1.msra.mxu0 0.0
      %1935 = vmatprep.subr.mxu0 0.0
      %1936 = vmatpush1.msra.mxu0 0.0
      %1937 = vmatprep.subr.mxu0 0.0
      %1938 = vmatpush1.msra.mxu0 0.0
      %1939 = vmatprep.subr.mxu0 0.0
      %1940 = vmatpush1.msra.mxu0 0.0
      %1941 = vmatprep.subr.mxu0 0.0
      %1942 = vmatpush1.msra.mxu0 0.0
      %1943 = vmatprep.subr.mxu0 0.0
      %1944 = vmatpush1.msra.mxu0 0.0
      %1945 = vmatprep.subr.mxu0 0.0
      %1946 = vmatpush1.msra.mxu0 0.0
      %1947 = vmatprep.subr.mxu0 0.0
      %1948 = vmatpush1.msra.mxu0 0.0
      %1949 = vmatprep.subr.mxu0 0.0
      %1950 = vmatpush1.msra.mxu0 0.0
      %1951 = vmatprep.subr.mxu0 0.0
      %1952 = vmatpush1.msra.mxu0 0.0
      %1953 = vmatprep.subr.mxu0 0.0
      %1954 = vmatpush1.msra.mxu0 0.0
      %1955 = vmatprep.subr.mxu0 0.0
      %1956 = vmatpush1.msra.mxu0 0.0
      %1957 = vmatprep.subr.mxu0 0.0
      %1958 = vmatpush1.msra.mxu0 0.0
      %1959 = vmatprep.subr.mxu0 0.0
      %1960 = vmatpush1.msra.mxu0 0.0
      %1961 = vmatprep.subr.mxu0 %v1929
      %1962 = vmatpush1.msra.mxu0 %v1927
      %1963 = vmatprep.subr.mxu0 0.0
      %1964 = vmatpush2.msra.mxu0 0.0
      %1965 = vmatprep.subr.mxu0 0.0
      %1966 = vmatpush2.msra.mxu0 0.0
      %1967 = vmatprep.subr.mxu0 0.0
      %1968 = vmatpush2.msra.mxu0 0.0
      %1969 = vmatprep.subr.mxu0 0.0
      %1970 = vmatpush2.msra.mxu0 0.0
      %1971 = vmatprep.subr.mxu0 0.0
      %1972 = vmatpush2.msra.mxu0 0.0
      %1973 = vmatprep.subr.mxu0 0.0
      %1974 = vmatpush2.msra.mxu0 0.0
      %1975 = vmatprep.subr.mxu0 0.0
      %1976 = vmatpush2.msra.mxu0 0.0
      %1977 = vmatprep.subr.mxu0 0.0
      %1978 = vmatpush2.msra.mxu0 0.0
      %1979 = vmatprep.subr.mxu0 0.0
      %1980 = vmatpush2.msra.mxu0 0.0
      %1981 = vmatprep.subr.mxu0 0.0
      %1982 = vmatpush2.msra.mxu0 0.0
      %1983 = vmatprep.subr.mxu0 0.0
      %1984 = vmatpush2.msra.mxu0 0.0
      %1985 = vmatprep.subr.mxu0 0.0
      %1986 = vmatpush2.msra.mxu0 0.0
      %1987 = vmatprep.subr.mxu0 0.0
      %1988 = vmatpush2.msra.mxu0 0.0
      %1989 = vmatprep.subr.mxu0 0.0
      %1990 = vmatpush2.msra.mxu0 0.0
      %1991 = vmatprep.subr.mxu0 0.0
      %1992 = vmatpush2.msra.mxu0 0.0
      %1993 = vmatprep.subr.mxu0 0.0
      %1994 = vmatpush2.msra.mxu0 0.0
      %1995 = vmatprep.mubr.f32.mxu0 0.0
      %1996 = vmatmul.mubr.f32.gmra.mxu0 %v1925
      %v1997 = vpop.f32.mrf.mxu0
      %v1998 = vadd.f32 0.0, %v1997
      %v1999 = vpop.f32.mrf.mxu0
      %v2000 = vadd.f32 0.0, %v1999
      %2001 = vdwg.mxu0
      %v2002 = vadd.f32 %v1910, %v1998
      %v2003 = vadd.f32 %v1911, %v2000
      %2004 = vrot.lane.b32.xlu0 %v1192, 94
      %v2005 = vpop.permute.xlu0 %2004
      %2006 = vrot.lane.b32.xlu0 %v1193, 94
      %v2007 = vpop.permute.xlu0 %2006
      %2008 = vrot.lane.b32.xlu0 0.0, 94
      %v2009 = vpop.permute.xlu0 %2008
      %vm2010 = vcmask 769024
      %v2011 = vsel %vm2010, %v2005, %v2007
      %v2012 = vsel %vm2010, %v2007, %v2009
      %v2015 = vsel %vm1435, %v2011, 0.0
      %v2016 = vsel %vm1436, %v2012, 0.0
      %s2017 = scalar_lea.vmem %s7, 32
      %v2018 = vld [vmem:[%s2017] sm:$0xf]
      %v2019 = vmul.f32 %v2018, %v1253
      %v2021 = vsel %vm338, %v2019, 0
      %v2024 = vsel %vm345, %v2015, 0
      %v2027 = vsel %vm345, %v2016, 0
      %2029 = vmatprep.subr.mxu0 0.0
      %2030 = vmatpush1.msra.mxu0 0.0
      %2031 = vmatprep.subr.mxu0 0.0
      %2032 = vmatpush1.msra.mxu0 0.0
      %2033 = vmatprep.subr.mxu0 0.0
      %2034 = vmatpush1.msra.mxu0 0.0
      %2035 = vmatprep.subr.mxu0 0.0
      %2036 = vmatpush1.msra.mxu0 0.0
      %2037 = vmatprep.subr.mxu0 0.0
      %2038 = vmatpush1.msra.mxu0 0.0
      %2039 = vmatprep.subr.mxu0 0.0
      %2040 = vmatpush1.msra.mxu0 0.0
      %2041 = vmatprep.subr.mxu0 0.0
      %2042 = vmatpush1.msra.mxu0 0.0
      %2043 = vmatprep.subr.mxu0 0.0
      %2044 = vmatpush1.msra.mxu0 0.0
      %2045 = vmatprep.subr.mxu0 0.0
      %2046 = vmatpush1.msra.mxu0 0.0
      %2047 = vmatprep.subr.mxu0 0.0
      %2048 = vmatpush1.msra.mxu0 0.0
      %2049 = vmatprep.subr.mxu0 0.0
      %2050 = vmatpush1.msra.mxu0 0.0
      %2051 = vmatprep.subr.mxu0 0.0
      %2052 = vmatpush1.msra.mxu0 0.0
      %2053 = vmatprep.subr.mxu0 0.0
      %2054 = vmatpush1.msra.mxu0 0.0
      %2055 = vmatprep.subr.mxu0 0.0
      %2056 = vmatpush1.msra.mxu0 0.0
      %2057 = vmatprep.subr.mxu0 0.0
      %2058 = vmatpush1.msra.mxu0 0.0
      %2059 = vmatprep.subr.mxu0 %v2027
      %2060 = vmatpush1.msra.mxu0 %v2024
      %2061 = vmatprep.subr.mxu0 0.0
      %2062 = vmatpush2.msra.mxu0 0.0
      %2063 = vmatprep.subr.mxu0 0.0
      %2064 = vmatpush2.msra.mxu0 0.0
      %2065 = vmatprep.subr.mxu0 0.0
      %2066 = vmatpush2.msra.mxu0 0.0
      %2067 = vmatprep.subr.mxu0 0.0
      %2068 = vmatpush2.msra.mxu0 0.0
      %2069 = vmatprep.subr.mxu0 0.0
      %2070 = vmatpush2.msra.mxu0 0.0
      %2071 = vmatprep.subr.mxu0 0.0
      %2072 = vmatpush2.msra.mxu0 0.0
      %2073 = vmatprep.subr.mxu0 0.0
      %2074 = vmatpush2.msra.mxu0 0.0
      %2075 = vmatprep.subr.mxu0 0.0
      %2076 = vmatpush2.msra.mxu0 0.0
      %2077 = vmatprep.subr.mxu0 0.0
      %2078 = vmatpush2.msra.mxu0 0.0
      %2079 = vmatprep.subr.mxu0 0.0
      %2080 = vmatpush2.msra.mxu0 0.0
      %2081 = vmatprep.subr.mxu0 0.0
      %2082 = vmatpush2.msra.mxu0 0.0
      %2083 = vmatprep.subr.mxu0 0.0
      %2084 = vmatpush2.msra.mxu0 0.0
      %2085 = vmatprep.subr.mxu0 0.0
      %2086 = vmatpush2.msra.mxu0 0.0
      %2087 = vmatprep.subr.mxu0 0.0
      %2088 = vmatpush2.msra.mxu0 0.0
      %2089 = vmatprep.subr.mxu0 0.0
      %2090 = vmatpush2.msra.mxu0 0.0
      %2091 = vmatprep.subr.mxu0 0.0
      %2092 = vmatpush2.msra.mxu0 0.0
      %2093 = vmatprep.mubr.f32.mxu0 0.0
      %2094 = vmatmul.mubr.f32.gmra.mxu0 %v2021
      %v2095 = vpop.f32.mrf.mxu0
      %v2096 = vadd.f32 0.0, %v2095
      %v2097 = vpop.f32.mrf.mxu0
      %v2098 = vadd.f32 0.0, %v2097
      %2099 = vdwg.mxu0
      %v2100 = vadd.f32 %v2002, %v2096
      %v2101 = vadd.f32 %v2003, %v2098
      %v2102 = vsel %vm345, %v2100, 0.0
      %v2103 = vsel %vm345, %v2101, 0.0
      %v2104 = vadd.f32 %v2102, %v2103
      %2105 = vadd.xlane.f32.xlu0 %v2104
      %v2106 = vpop.xlane.xlu0 %2105
      %v2107 = vmul.f32 %v2106, 0.00390625
      %v2108 = vsub.f32 %v2100, %v2107
      %v2109 = vsub.f32 %v2101, %v2107
      %v2110 = vmax.f32 %v2108, 0.0
      %v2111 = vmax.f32 %v2109, 0.0
      %2112 = vmatprep.subr.mxu0 0.0
      %2113 = vmatpush1.xpose.msra.mxu0 0.0
      %2114 = vmatprep.subr.mxu0 0.0
      %2115 = vmatpush1.xpose.msra.mxu0 0.0
      %2116 = vmatprep.subr.mxu0 0.0
      %2117 = vmatpush1.xpose.msra.mxu0 0.0
      %2118 = vmatprep.subr.mxu0 0.0
      %2119 = vmatpush1.xpose.msra.mxu0 0.0
      %2120 = vmatprep.subr.mxu0 0.0
      %2121 = vmatpush1.xpose.msra.mxu0 0.0
      %2122 = vmatprep.subr.mxu0 0.0
      %2123 = vmatpush1.xpose.msra.mxu0 0.0
      %2124 = vmatprep.subr.mxu0 0.0
      %2125 = vmatpush1.xpose.msra.mxu0 0.0
      %2126 = vmatprep.subr.mxu0 0.0
      %2127 = vmatpush1.xpose.msra.mxu0 0.0
      %2128 = vmatprep.subr.mxu0 0.0
      %2129 = vmatpush1.xpose.msra.mxu0 0.0
      %2130 = vmatprep.subr.mxu0 0.0
      %2131 = vmatpush1.xpose.msra.mxu0 0.0
      %2132 = vmatprep.subr.mxu0 0.0
      %2133 = vmatpush1.xpose.msra.mxu0 0.0
      %2134 = vmatprep.subr.mxu0 0.0
      %2135 = vmatpush1.xpose.msra.mxu0 0.0
      %2136 = vmatprep.subr.mxu0 0.0
      %2137 = vmatpush1.xpose.msra.mxu0 0.0
      %2138 = vmatprep.subr.mxu0 0.0
      %2139 = vmatpush1.xpose.msra.mxu0 0.0
      %2140 = vmatprep.subr.mxu0 0.0
      %2141 = vmatpush1.xpose.msra.mxu0 0.0
      %2142 = vmatprep.subr.mxu0 %v2101
      %2143 = vmatpush1.xpose.msra.mxu0 %v2100
      %2144 = vmatprep.subr.mxu0 0.0
      %2145 = vmatpush2.xpose.msra.mxu0 0.0
      %2146 = vmatprep.subr.mxu0 0.0
      %2147 = vmatpush2.xpose.msra.mxu0 0.0
      %2148 = vmatprep.subr.mxu0 0.0
      %2149 = vmatpush2.xpose.msra.mxu0 0.0
      %2150 = vmatprep.subr.mxu0 0.0
      %2151 = vmatpush2.xpose.msra.mxu0 0.0
      %2152 = vmatprep.subr.mxu0 0.0
      %2153 = vmatpush2.xpose.msra.mxu0 0.0
      %2154 = vmatprep.subr.mxu0 0.0
      %2155 = vmatpush2.xpose.msra.mxu0 0.0
      %2156 = vmatprep.subr.mxu0 0.0
      %2157 = vmatpush2.xpose.msra.mxu0 0.0
      %2158 = vmatprep.subr.mxu0 0.0
      %2159 = vmatpush2.xpose.msra.mxu0 0.0
      %2160 = vmatprep.subr.mxu0 0.0
      %2161 = vmatpush2.xpose.msra.mxu0 0.0
      %2162 = vmatprep.subr.mxu0 0.0
      %2163 = vmatpush2.xpose.msra.mxu0 0.0
      %2164 = vmatprep.subr.mxu0 0.0
      %2165 = vmatpush2.xpose.msra.mxu0 0.0
      %2166 = vmatprep.subr.mxu0 0.0
      %2167 = vmatpush2.xpose.msra.mxu0 0.0
      %2168 = vmatprep.subr.mxu0 0.0
      %2169 = vmatpush2.xpose.msra.mxu0 0.0
      %2170 = vmatprep.subr.mxu0 0.0
      %2171 = vmatpush2.xpose.msra.mxu0 0.0
      %2172 = vmatprep.subr.mxu0 0.0
      %2173 = vmatpush2.xpose.msra.mxu0 0.0
      %2174 = vmatprep.subr.mxu0 0.0
      %2175 = vmatpush2.xpose.msra.mxu0 0.0
      %2176 = vmatprep.mubr.f32.mxu0 1.0
      %2177 = vmatmul.mubr.f32.gmra.mxu0 1.0
      %v2178 = vpop.f32.mrf.mxu0
      %v2179 = vadd.f32 0.0, %v2178
      %v2180 = vpop.f32.mrf.mxu0
      %2181 = vdwg.mxu0
      %v2182 = vmul.f32 %v2100, %v2100
      %v2183 = vmul.f32 %v2101, %v2101
      %2184 = vmatprep.subr.mxu0 0.0
      %2185 = vmatpush1.xpose.msra.mxu0 0.0
      %2186 = vmatprep.subr.mxu0 0.0
      %2187 = vmatpush1.xpose.msra.mxu0 0.0
      %2188 = vmatprep.subr.mxu0 0.0
      %2189 = vmatpush1.xpose.msra.mxu0 0.0
      %2190 = vmatprep.subr.mxu0 0.0
      %2191 = vmatpush1.xpose.msra.mxu0 0.0
      %2192 = vmatprep.subr.mxu0 0.0
      %2193 = vmatpush1.xpose.msra.mxu0 0.0
      %2194 = vmatprep.subr.mxu0 0.0
      %2195 = vmatpush1.xpose.msra.mxu0 0.0
      %2196 = vmatprep.subr.mxu0 0.0
      %2197 = vmatpush1.xpose.msra.mxu0 0.0
      %2198 = vmatprep.subr.mxu0 0.0
      %2199 = vmatpush1.xpose.msra.mxu0 0.0
      %2200 = vmatprep.subr.mxu0 0.0
      %2201 = vmatpush1.xpose.msra.mxu0 0.0
      %2202 = vmatprep.subr.mxu0 0.0
      %2203 = vmatpush1.xpose.msra.mxu0 0.0
      %2204 = vmatprep.subr.mxu0 0.0
      %2205 = vmatpush1.xpose.msra.mxu0 0.0
      %2206 = vmatprep.subr.mxu0 0.0
      %2207 = vmatpush1.xpose.msra.mxu0 0.0
      %2208 = vmatprep.subr.mxu0 0.0
      %2209 = vmatpush1.xpose.msra.mxu0 0.0
      %2210 = vmatprep.subr.mxu0 0.0
      %2211 = vmatpush1.xpose.msra.mxu0 0.0
      %2212 = vmatprep.subr.mxu0 0.0
      %2213 = vmatpush1.xpose.msra.mxu0 0.0
      %2214 = vmatprep.subr.mxu0 %v2183
      %2215 = vmatpush1.xpose.msra.mxu0 %v2182
      %2216 = vmatprep.subr.mxu0 0.0
      %2217 = vmatpush2.xpose.msra.mxu0 0.0
      %2218 = vmatprep.subr.mxu0 0.0
      %2219 = vmatpush2.xpose.msra.mxu0 0.0
      %2220 = vmatprep.subr.mxu0 0.0
      %2221 = vmatpush2.xpose.msra.mxu0 0.0
      %2222 = vmatprep.subr.mxu0 0.0
      %2223 = vmatpush2.xpose.msra.mxu0 0.0
      %2224 = vmatprep.subr.mxu0 0.0
      %2225 = vmatpush2.xpose.msra.mxu0 0.0
      %2226 = vmatprep.subr.mxu0 0.0
      %2227 = vmatpush2.xpose.msra.mxu0 0.0
      %2228 = vmatprep.subr.mxu0 0.0
      %2229 = vmatpush2.xpose.msra.mxu0 0.0
      %2230 = vmatprep.subr.mxu0 0.0
      %2231 = vmatpush2.xpose.msra.mxu0 0.0
      %2232 = vmatprep.subr.mxu0 0.0
      %2233 = vmatpush2.xpose.msra.mxu0 0.0
      %2234 = vmatprep.subr.mxu0 0.0
      %2235 = vmatpush2.xpose.msra.mxu0 0.0
      %2236 = vmatprep.subr.mxu0 0.0
      %2237 = vmatpush2.xpose.msra.mxu0 0.0
      %2238 = vmatprep.subr.mxu0 0.0
      %2239 = vmatpush2.xpose.msra.mxu0 0.0
      %2240 = vmatprep.subr.mxu0 0.0
      %2241 = vmatpush2.xpose.msra.mxu0 0.0
      %2242 = vmatprep.subr.mxu0 0.0
      %2243 = vmatpush2.xpose.msra.mxu0 0.0
      %2244 = vmatprep.subr.mxu0 0.0
      %2245 = vmatpush2.xpose.msra.mxu0 0.0
      %2246 = vmatprep.subr.mxu0 0.0
      %2247 = vmatpush2.xpose.msra.mxu0 0.0
      %2248 = vmatprep.mubr.f32.mxu0 1.0
      %2249 = vmatmul.mubr.f32.gmra.mxu0 1.0
      %v2250 = vpop.f32.mrf.mxu0
      %v2251 = vadd.f32 0.0, %v2250
      %v2252 = vpop.f32.mrf.mxu0
      %2253 = vdwg.mxu0
      %v2254 = vmul.f32 %v2179, 0.00390625
      %v2255 = vmul.f32 %v2251, 0.00390625
      %v2256 = vmul.f32 %v2254, %v2254
      %v2257 = vsub.f32 %v2255, %v2256
      %v2258 = vmax.f32 %v2257, 0.0
      %v2259 = vadd.f32 %v2258, 1e-05
      %v2260 = vrsqrt.pop %v2259
      %v2261 = vld [vmem:[%s8] sm:$0xff]
      %v2262 = vld [vmem:[%s8 + $0x8] sm:$0xff]
      %v2263 = vlaneseq
      %v2264 = vshrl.u32 %v2263, 7
      %v2265 = vsub.s32 0, %v2264
      %v2266 = vrot.slane %v2260, %v2265
      %v2267 = vmul.f32 %v2261, %v2266
      %v2268 = vmul.f32 %v2262, %v2266
      %v2270 = vsel %vm338, %v2267, 0
      %v2273 = vsel %vm338, %v2268, 0
      %v2276 = vsel %vm345, %v2110, 0
      %v2279 = vsel %vm345, %v2111, 0
      %2281 = vmatprep.subr.mxu0 0.0
      %2282 = vmatpush1.msra.mxu0 0.0
      %2283 = vmatprep.subr.mxu0 0.0
      %2284 = vmatpush1.msra.mxu0 0.0
      %2285 = vmatprep.subr.mxu0 0.0
      %2286 = vmatpush1.msra.mxu0 0.0
      %2287 = vmatprep.subr.mxu0 0.0
      %2288 = vmatpush1.msra.mxu0 0.0
      %2289 = vmatprep.subr.mxu0 0.0
      %2290 = vmatpush1.msra.mxu0 0.0
      %2291 = vmatprep.subr.mxu0 0.0
      %2292 = vmatpush1.msra.mxu0 0.0
      %2293 = vmatprep.subr.mxu0 0.0
      %2294 = vmatpush1.msra.mxu0 0.0
      %2295 = vmatprep.subr.mxu0 0.0
      %2296 = vmatpush1.msra.mxu0 0.0
      %2297 = vmatprep.subr.mxu0 0.0
      %2298 = vmatpush1.msra.mxu0 0.0
      %2299 = vmatprep.subr.mxu0 0.0
      %2300 = vmatpush1.msra.mxu0 0.0
      %2301 = vmatprep.subr.mxu0 0.0
      %2302 = vmatpush1.msra.mxu0 0.0
      %2303 = vmatprep.subr.mxu0 0.0
      %2304 = vmatpush1.msra.mxu0 0.0
      %2305 = vmatprep.subr.mxu0 0.0
      %2306 = vmatpush1.msra.mxu0 0.0
      %2307 = vmatprep.subr.mxu0 0.0
      %2308 = vmatpush1.msra.mxu0 0.0
      %2309 = vmatprep.subr.mxu0 0.0
      %2310 = vmatpush1.msra.mxu0 0.0
      %2311 = vmatprep.subr.mxu0 %v2279
      %2312 = vmatpush1.msra.mxu0 %v2276
      %2313 = vmatprep.subr.mxu0 0.0
      %2314 = vmatpush2.msra.mxu0 0.0
      %2315 = vmatprep.subr.mxu0 0.0
      %2316 = vmatpush2.msra.mxu0 0.0
      %2317 = vmatprep.subr.mxu0 0.0
      %2318 = vmatpush2.msra.mxu0 0.0
      %2319 = vmatprep.subr.mxu0 0.0
      %2320 = vmatpush2.msra.mxu0 0.0
      %2321 = vmatprep.subr.mxu0 0.0
      %2322 = vmatpush2.msra.mxu0 0.0
      %2323 = vmatprep.subr.mxu0 0.0
      %2324 = vmatpush2.msra.mxu0 0.0
      %2325 = vmatprep.subr.mxu0 0.0
      %2326 = vmatpush2.msra.mxu0 0.0
      %2327 = vmatprep.subr.mxu0 0.0
      %2328 = vmatpush2.msra.mxu0 0.0
      %2329 = vmatprep.subr.mxu0 0.0
      %2330 = vmatpush2.msra.mxu0 0.0
      %2331 = vmatprep.subr.mxu0 0.0
      %2332 = vmatpush2.msra.mxu0 0.0
      %2333 = vmatprep.subr.mxu0 0.0
      %2334 = vmatpush2.msra.mxu0 0.0
      %2335 = vmatprep.subr.mxu0 0.0
      %2336 = vmatpush2.msra.mxu0 0.0
      %2337 = vmatprep.subr.mxu0 0.0
      %2338 = vmatpush2.msra.mxu0 0.0
      %2339 = vmatprep.subr.mxu0 0.0
      %2340 = vmatpush2.msra.mxu0 0.0
      %2341 = vmatprep.subr.mxu0 0.0
      %2342 = vmatpush2.msra.mxu0 0.0
      %2343 = vmatprep.subr.mxu0 0.0
      %2344 = vmatpush2.msra.mxu0 0.0
      %2345 = vmatprep.mubr.f32.mxu0 0.0
      %2346 = vmatmul.mubr.f32.gmra.mxu0 %v2270
      %v2347 = vpop.f32.mrf.mxu0
      %v2348 = vadd.f32 %v779, %v2347
      %v2349 = vpop.f32.mrf.mxu0
      %v2350 = vadd.f32 %v780, %v2349
      %2351 = vmatprep.mubr.f32.mxu0 0.0
      %2352 = vmatmul.mubr.f32.gmra.mxu0 %v2273
      %v2353 = vpop.f32.mrf.mxu0
      %v2354 = vadd.f32 %v781, %v2353
      %v2355 = vpop.f32.mrf.mxu0
      %v2356 = vadd.f32 %v782, %v2355
      %2357 = vdwg.mxu0
      %2358 = vst [vmem:[%s332] sm:$0xff] %v2348
      %2359 = vst [vmem:[%s332 + $0x8] sm:$0xff] %v2350
      %2360 = vst [vmem:[%s332 + $0x10] sm:$0xff] %v2354
      %2361 = vst [vmem:[%s332 + $0x18] sm:$0xff] %v2356
      %p2362 = scmp.lt.s32.totalorder %s20, 1
      %s2363 = scalar_select %p2362, %s20, 1
      %s2364 = smul.addr %s2363, 4
      %s2365 = smul.addr %s2364, 8
      %s2366 = scalar_lea.vmem %s9, %s2365
      // Predicated region
      $region57: #{rn_msgcb_u2_v2.1} parent=55 // pred_check
        %p2367 = pneg %p232
      $region58: #{rn_msgcb_u2_v2.1} parent=55 // pred_check_branch
        %2369 = sbr.rel (%p2367) target = $region60
      $region59: #{rn_msgcb_u2_v2.1} parent=55 // pred_region
        _
      $region60: #{rn_msgcb_u2_v2.1} parent=55 // pred_fallthru
        _
    $region56: #{rn_msgcb_u2_v2.1} parent=5 // pred_fallthru
      _
    %p2370 = scmp.le.s32.totalorder 2, %s15
    // Predicated region
    $region61: #{rn_msgcb_u2_v2.1} parent=5 // pred_check
      %p2371 = pneg %p2370
    $region62: #{rn_msgcb_u2_v2.1} parent=5 // pred_check_branch
      %2373 = sbr.rel (%p2371) target = $region64
    $region63: #{rn_msgcb_u2_v2.1} parent=5 // pred_region
      %s2374 = ssub.s32 %s15, 2
      // Predicated region
      $region65: #{rn_msgcb_u2_v2.1} parent=63 // pred_check
        %p2375 = pneg %p238
      $region66: #{rn_msgcb_u2_v2.1} parent=63 // pred_check_branch
        %2377 = sbr.rel (%p2375) target = $region68
      $region67: #{rn_msgcb_u2_v2.1} parent=63 // pred_region
        %p2378 = scmp.lt.s32.totalorder %s21, 1
        %s2379 = scalar_select %p2378, %s21, 1
        %s2380 = smul.addr %s2379, 4
        %s2381 = smul.addr %s2380, 8
        %s2382 = scalar_lea.vmem %s9, %s2381
      $region68: #{rn_msgcb_u2_v2.1} parent=63 // pred_fallthru
        _
    $region64: #{rn_msgcb_u2_v2.1} parent=5 // pred_fallthru
      _
  $region6: #{rn_msgcb_u2_v2.1} parent=0 // loop_footer
    %s19 = sadd.s32 1, %s15
  $region7: #{rn_msgcb_u2_v2.1} parent=0 // loop_footer_branch
    %14 = sbr.rel target = $region3
  $region8: #{rn_msgcb_u2_v2.1} parent=0 // loop_exit
    _

</llo_original>
